<compile_context>
chip_gen: v7x
topology: tpu7x:2x2x1
jax: 0.10.0
libtpu: 0.0.40
codegen_flags: <defaults>
</compile_context>

<pallas_src>
import functools
import itertools

import numpy as np
import jax
import jax.numpy as jnp
from jax import lax
from jax.experimental import pallas as pl
from jax.experimental.pallas import tpu as pltpu


_CORNERS = tuple(itertools.product((0, 1), repeat=3))   # (ox, oy, oz), z fastest


def _round_up(x, m):
    return ((x + m - 1) // m) * m


def _num_tensorcores_per_device():
    # v7x exposes 2 TensorCores per device; the inference parts (v5e/v6e) one.
    try:
        kind = jax.devices()[0].device_kind.lower()
    except Exception:
        return 1
    return 2 if "7" in kind else 1


def _dense_grid_kernel(xyz_ref, tab_ref, out_ref, *, n_grid, min_corner,
                       voxel_size, g_pad, c_pad, tile):
    """One tile of points (points along lanes).

    xyz_ref : (8, tile) f32            rows 0..2 = x, y, z (rows 3..7 zero)
    tab_ref : (2*8*c_pad, g_pad) bf16  corner-shifted table; rows [0, 8*c_pad)
                                       = bf16 hi part, rest = bf16 lo residual
    out_ref : (c_pad, tile) f32        col p = [geo, feat...] of point p
    """
    gp = n_grid + 1
    xyz = xyz_ref[...]                                    # (8, tile)

    idx = []      # per-axis voxel index, (1, tile) int32
    frac = []     # per-axis fractional offset, (1, tile) f32
    valid = None  # (1, tile) bool: point inside the volume
    for d in range(3):
        c = xyz[d:d + 1, :]                               # (1, tile)
        mn = float(min_corner[d])
        vs = float(voxel_size[d])
        mx = mn + vs * n_grid
        u = (c - mn) * (1.0 / vs)                         # in [0, n_grid] if inside
        inside = (c >= mn) & (c <= mx)
        valid = inside if valid is None else (valid & inside)
        f = jnp.clip(jnp.floor(u), 0.0, float(n_grid - 1))
        idx.append(f.astype(jnp.int32))
        frac.append(u - f)
    ix, iy, iz = idx
    tx, ty, tz = frac
    validf = jnp.where(valid, 1.0, 0.0)                   # (1, tile) f32

    base = ix * (gp * gp) + iy * gp + iz                  # (1, tile) int32

    # One bf16 0/1 one-hot over the whole (padded) flat-index range; a single
    # MXU matmul gathers all 8 corner rows (hi and lo) of every point.  0/1 is
    # exact in bf16 and the table is an exact bf16 hi/lo split, so the gather
    # is f32-accurate (~1e-5 rel) without Precision.HIGHEST.
    iota = lax.broadcasted_iota(jnp.int32, (g_pad, tile), 0)
    onehot = (iota == base).astype(jnp.bfloat16)          # (g_pad, tile) bf16
    acc2 = jnp.dot(tab_ref[...], onehot,
                   preferred_element_type=jnp.float32)    # (2*8*c_pad, tile)
    half = 8 * c_pad
    acc = acc2[:half, :] + acc2[half:, :]                 # hi + lo, (8*c_pad, tile)

    # Trilinear weights (and the validity mask, folded in once) on the VPU.
    wxy = ((1.0 - tx) * (1.0 - ty), (1.0 - tx) * ty,
           tx * (1.0 - ty), tx * ty)                      # indexed by (ox, oy)
    wz = ((1.0 - tz) * validf, tz * validf)               # indexed by oz
    out = None
    for j, (ox, oy, oz) in enumerate(_CORNERS):
        w = wxy[2 * ox + oy] * wz[oz]                     # (1, tile)
        term = w * acc[j * c_pad:(j + 1) * c_pad, :]      # (c_pad, tile)
        out = term if out is None else out + term
    out_ref[...] = out


class DenseGridEmbedderPallas:
    """JAX/Pallas port of arcnerf DenseGridEmbedder (radius_init=None path)."""

    def __init__(self, n_grid=8, origin=(0.0, 0.0, 0.0), side=2.0,
                 include_input=True, W_feat=4, feat_only=False, std=1e-4,
                 key=jax.random.PRNGKey(0)):
        # TODO(synk): radius_init (SDF sphere init) path is not ported; the torch
        # forward for that branch references an undefined attribute anyway.
        self.n_grid = int(n_grid)
        self.include_input = bool(include_input)
        self.W_feat = int(W_feat)
        self.feat_only = bool(feat_only)
        self.out_dim = include_input * 3 + W_feat + (1 - int(feat_only))
        self._n_tc = _num_tensorcores_per_device()

        side = float(side)
        self.voxel_size = tuple(side / n_grid for _ in range(3))
        self.min_corner = tuple(float(o) - side / 2.0 for o in origin)

        gp = self.n_grid + 1
        g = gp ** 3
        C = 1 + self.W_feat
        k_val, k_feat = jax.random.split(key)
        grid_value = jax.random.normal(k_val, (g, 1), jnp.float32)   # normal_ init
        if W_feat > 0:
            grid_feat = jax.random.uniform(k_feat, (g, W_feat), jnp.float32,
                                           minval=-std, maxval=std)  # uniform_ init
            table = jnp.concatenate([grid_value, grid_feat], axis=1)
        else:
            table = grid_value
        self.g = g
        self.table = table                                # (g, C) f32 (reference)

        # Lane-dense, per-corner shifted table, merged bf16 hi/lo stack.
        # The whole table must fit in VMEM, so this path targets small n_grid.
        # TODO(synk): large n_grid (e.g. torch default 128) needs a G-chunked
        # "arbitrary" grid axis (pl.when-guarded accumulator) or a scalar
        # prefetch + pl.ANY DMA-gather path; budget it against v7x's 64 MiB
        # VMEM (not 128 MiB), so the resident limit is ~n_grid<=50.
        self.c_pad = _round_up(C, 8)
        self.g_pad = _round_up(g, 128)
        max_off = gp * gp + gp + 1                        # offset of corner (1,1,1)
        src = jnp.pad(table, ((0, self.g_pad + max_off - g), (0, 0)))
        blocks = []
        for (ox, oy, oz) in _CORNERS:
            off = ox * gp * gp + oy * gp + oz
            blk = src[off:off + self.g_pad, :].T          # (C, g_pad): table[flat+off]
            # NOTE: the (c_pad - C) zero rows per corner waste some MXU MACs;
            # worth trimming only on v5e (MXU-bound) -- left padded here.
            blocks.append(jnp.pad(blk, ((0, self.c_pad - C), (0, 0))))
        stacked = jnp.concatenate(blocks, axis=0)         # (8*c_pad, g_pad) f32
        hi = stacked.astype(jnp.bfloat16)
        lo = (stacked - hi.astype(jnp.float32)).astype(jnp.bfloat16)
        # Single merged LHS: rows [0, 8*c_pad) = hi, rows [8*c_pad, 16*c_pad) = lo.
        self.table_merged = jnp.concatenate([hi, lo], axis=0)   # (128, g_pad) bf16

    def _pick_tile(self, B):
        # Large tiles amortize the ~0.35us per-grid-step overhead.  On 2-TC
        # parts (v7x) keep an even number of >=2 grid steps so the "parallel"
        # axis feeds both TensorCores; on single-TC parts just take the
        # largest tile that fits.
        cap = 2048
        b128 = _round_up(max(B, 1), 128)
        if self._n_tc > 1 and b128 >= 256:
            n_steps = max(2, _round_up(pl.cdiv(b128, cap), 2))
            return min(cap, _round_up(pl.cdiv(b128, n_steps), 128))
        return min(cap, b128)

    def __call__(self, xyz):
        assert xyz.ndim == 2 and xyz.shape[-1] == 3, 'Must be (B, 3) tensor'
        B = xyz.shape[0]
        tile = self._pick_tile(B)
        b_pad = _round_up(B, tile)
        C = 1 + self.W_feat

        # Points in the lane dimension: (8, b_pad), rows 0..2 = x, y, z.
        xyz_f = xyz.astype(jnp.float32)
        xyz_t = jnp.pad(xyz_f.T, ((0, 5), (0, b_pad - B)))

        kernel = functools.partial(
            _dense_grid_kernel,
            n_grid=self.n_grid, min_corner=self.min_corner,
            voxel_size=self.voxel_size, g_pad=self.g_pad,
            c_pad=self.c_pad, tile=tile)

        n_rows = 2 * 8 * self.c_pad
        out_t = pl.pallas_call(
            kernel,
            out_shape=jax.ShapeDtypeStruct((self.c_pad, b_pad), jnp.float32),
            grid_spec=pltpu.PrefetchScalarGridSpec(
                num_scalar_prefetch=0,
                grid=(b_pad // tile,),
                in_specs=[
                    pl.BlockSpec((8, tile), lambda i: (0, i)),
                    # Constant block index -> table block stays resident; Pallas
                    # skips the per-step re-DMA of an unchanged block.
                    pl.BlockSpec((n_rows, self.g_pad), lambda i: (0, 0)),
                ],
                out_specs=pl.BlockSpec((self.c_pad, tile), lambda i: (0, i)),
            ),
            compiler_params=pltpu.CompilerParams(
                dimension_semantics=("parallel",),
                vmem_limit_bytes=48 * 1024 * 1024),
        )(xyz_t, self.table_merged)

        geo_feat = out_t.T[:B, :C]                        # (B, C)
        parts = [geo_feat[:, :1]]                         # geo value
        if self.include_input:
            parts.append(xyz_f)                           # raw xyz
        if self.W_feat > 0:
            parts.append(geo_feat[:, 1:])                 # feat
        out = jnp.concatenate(parts, axis=-1)
        if self.feat_only and self.W_feat > 0:
            out = out[:, 1:]
        return out


def _reference_forward(xyz, table, n_grid, min_corner, voxel_size,
                       include_input, W_feat, feat_only):
    """Pure-JAX reference mirroring the torch module semantics."""
    xyz = xyz.astype(jnp.float32)
    mn = jnp.asarray(min_corner, jnp.float32)
    vs = jnp.asarray(voxel_size, jnp.float32)
    mx = mn + vs * n_grid
    gp = n_grid + 1

    u = (xyz - mn) / vs
    valid = jnp.all((xyz >= mn) & (xyz <= mx), axis=-1)
    idx = jnp.clip(jnp.floor(u), 0.0, float(n_grid - 1)).astype(jnp.int32)
    t = u - idx.astype(jnp.float32)

    acc = jnp.zeros((xyz.shape[0], table.shape[1]), jnp.float32)
    for ox, oy, oz in itertools.product((0, 1), repeat=3):
        wx = t[:, 0] if ox else (1.0 - t[:, 0])
        wy = t[:, 1] if oy else (1.0 - t[:, 1])
        wz = t[:, 2] if oz else (1.0 - t[:, 2])
        w = (wx * wy * wz)[:, None]
        flat = (idx[:, 0] + ox) * (gp * gp) + (idx[:, 1] + oy) * gp + (idx[:, 2] + oz)
        acc = acc + w * table[flat]
    acc = jnp.where(valid[:, None], acc, 0.0)

    parts = [acc[:, :1]]
    if include_input:
        parts.append(xyz)
    if W_feat > 0:
        parts.append(acc[:, 1:])
    out = jnp.concatenate(parts, axis=-1)
    if feat_only and W_feat > 0:
        out = out[:, 1:]
    return out


if __name__ == "__main__":
    key = jax.random.PRNGKey(0)
    k_xyz, k_param = jax.random.split(key)

    B = 200
    n_grid = 8
    W_feat = 4
    # Points in [-1.2, 1.2]^3 so some fall outside the side=2.0 volume
    # (exercises the valid_idx / zero-fill path).
    xyz = jax.random.uniform(k_xyz, (B, 3), jnp.float32, minval=-1.2, maxval=1.2)

    embedder = DenseGridEmbedderPallas(
        n_grid=n_grid, origin=(0.0, 0.0, 0.0), side=2.0,
        include_input=True, W_feat=W_feat, feat_only=False, key=k_param)

    out = embedder(xyz)
    out = jax.block_until_ready(out)
    assert out.shape == (B, embedder.out_dim), out.shape

    ref = _reference_forward(
        xyz, embedder.table, n_grid,
        embedder.min_corner, embedder.voxel_size,
        include_input=True, W_feat=W_feat, feat_only=False)

    np.testing.assert_allclose(np.asarray(out), np.asarray(ref),
                               rtol=1e-3, atol=1e-3)
    print("KERNEL_OK")
</pallas_src>

<mosaic_0001>
module attributes {stable_mosaic.version = 11 : i64} {
  func.func @_dense_grid_kernel(%arg0: i32, %arg1: memref<8x256xf32, #tpu.memory_space<vmem>>, %arg2: memref<128x768xbf16, #tpu.memory_space<vmem>>, %arg3: memref<8x256xf32, #tpu.memory_space<vmem>>) attributes {dimension_semantics = [#tpu.dimension_semantics<parallel>], iteration_bounds = array<i64: 1>, scalar_prefetch = 0 : i64, scratch_operands = 0 : i64, tpu.core_type = #tpu.core_type<tc>, window_params = [{transform_indices = @transform_0, window_bounds = array<i64: 8, 256>}, {pipeline_mode = #tpu.pipeline_mode<synchronous>, transform_indices = @transform_1, window_bounds = array<i64: 128, 768>}, {transform_indices = @transform_2, window_bounds = array<i64: 8, 256>}]} {
    %c0 = arith.constant 0 : index
    %c0_0 = arith.constant 0 : index
    %0 = vector.load %arg1[%c0, %c0_0] : memref<8x256xf32, #tpu.memory_space<vmem>>, vector<8x256xf32>
    %1 = vector.extract_strided_slice %0 {offsets = [0, 0], sizes = [1, 256], strides = [1, 1]} : vector<8x256xf32> to vector<1x256xf32>
    %cst = arith.constant -1.000000e+00 : f32
    %2 = vector.broadcast %cst : f32 to vector<1x256xf32>
    %3 = arith.subf %1, %2 : vector<1x256xf32>
    %cst_1 = arith.constant 4.000000e+00 : f32
    %4 = vector.broadcast %cst_1 : f32 to vector<1x256xf32>
    %5 = arith.mulf %3, %4 : vector<1x256xf32>
    %cst_2 = arith.constant -1.000000e+00 : f32
    %6 = vector.broadcast %cst_2 : f32 to vector<1x256xf32>
    %7 = arith.cmpf oge, %1, %6 : vector<1x256xf32>
    %cst_3 = arith.constant 1.000000e+00 : f32
    %8 = vector.broadcast %cst_3 : f32 to vector<1x256xf32>
    %9 = arith.cmpf ole, %1, %8 : vector<1x256xf32>
    %10 = arith.andi %7, %9 : vector<1x256xi1>
    %11 = math.floor %5 : vector<1x256xf32>
    %cst_4 = arith.constant 0.000000e+00 : f32
    %cst_5 = arith.constant 7.000000e+00 : f32
    %12 = vector.broadcast %cst_4 : f32 to vector<1x256xf32>
    %13 = arith.maximumf %12, %11 : vector<1x256xf32>
    %14 = vector.broadcast %cst_5 : f32 to vector<1x256xf32>
    %15 = arith.minimumf %14, %13 : vector<1x256xf32>
    %16 = arith.fptosi %15 : vector<1x256xf32> to vector<1x256xi32>
    %17 = arith.subf %5, %15 : vector<1x256xf32>
    %18 = vector.extract_strided_slice %0 {offsets = [1, 0], sizes = [1, 256], strides = [1, 1]} : vector<8x256xf32> to vector<1x256xf32>
    %cst_6 = arith.constant -1.000000e+00 : f32
    %19 = vector.broadcast %cst_6 : f32 to vector<1x256xf32>
    %20 = arith.subf %18, %19 : vector<1x256xf32>
    %cst_7 = arith.constant 4.000000e+00 : f32
    %21 = vector.broadcast %cst_7 : f32 to vector<1x256xf32>
    %22 = arith.mulf %20, %21 : vector<1x256xf32>
    %cst_8 = arith.constant -1.000000e+00 : f32
    %23 = vector.broadcast %cst_8 : f32 to vector<1x256xf32>
    %24 = arith.cmpf oge, %18, %23 : vector<1x256xf32>
    %cst_9 = arith.constant 1.000000e+00 : f32
    %25 = vector.broadcast %cst_9 : f32 to vector<1x256xf32>
    %26 = arith.cmpf ole, %18, %25 : vector<1x256xf32>
    %27 = arith.andi %24, %26 : vector<1x256xi1>
    %28 = arith.andi %10, %27 : vector<1x256xi1>
    %29 = math.floor %22 : vector<1x256xf32>
    %cst_10 = arith.constant 0.000000e+00 : f32
    %cst_11 = arith.constant 7.000000e+00 : f32
    %30 = vector.broadcast %cst_10 : f32 to vector<1x256xf32>
    %31 = arith.maximumf %30, %29 : vector<1x256xf32>
    %32 = vector.broadcast %cst_11 : f32 to vector<1x256xf32>
    %33 = arith.minimumf %32, %31 : vector<1x256xf32>
    %34 = arith.fptosi %33 : vector<1x256xf32> to vector<1x256xi32>
    %35 = arith.subf %22, %33 : vector<1x256xf32>
    %36 = vector.extract_strided_slice %0 {offsets = [2, 0], sizes = [1, 256], strides = [1, 1]} : vector<8x256xf32> to vector<1x256xf32>
    %cst_12 = arith.constant -1.000000e+00 : f32
    %37 = vector.broadcast %cst_12 : f32 to vector<1x256xf32>
    %38 = arith.subf %36, %37 : vector<1x256xf32>
    %cst_13 = arith.constant 4.000000e+00 : f32
    %39 = vector.broadcast %cst_13 : f32 to vector<1x256xf32>
    %40 = arith.mulf %38, %39 : vector<1x256xf32>
    %cst_14 = arith.constant -1.000000e+00 : f32
    %41 = vector.broadcast %cst_14 : f32 to vector<1x256xf32>
    %42 = arith.cmpf oge, %36, %41 : vector<1x256xf32>
    %cst_15 = arith.constant 1.000000e+00 : f32
    %43 = vector.broadcast %cst_15 : f32 to vector<1x256xf32>
    %44 = arith.cmpf ole, %36, %43 : vector<1x256xf32>
    %45 = arith.andi %42, %44 : vector<1x256xi1>
    %46 = arith.andi %28, %45 : vector<1x256xi1>
    %47 = math.floor %40 : vector<1x256xf32>
    %cst_16 = arith.constant 0.000000e+00 : f32
    %cst_17 = arith.constant 7.000000e+00 : f32
    %48 = vector.broadcast %cst_16 : f32 to vector<1x256xf32>
    %49 = arith.maximumf %48, %47 : vector<1x256xf32>
    %50 = vector.broadcast %cst_17 : f32 to vector<1x256xf32>
    %51 = arith.minimumf %50, %49 : vector<1x256xf32>
    %52 = arith.fptosi %51 : vector<1x256xf32> to vector<1x256xi32>
    %53 = arith.subf %40, %51 : vector<1x256xf32>
    %cst_18 = arith.constant 1.000000e+00 : f32
    %cst_19 = arith.constant 0.000000e+00 : f32
    %54 = vector.broadcast %cst_18 : f32 to vector<1x256xf32>
    %55 = vector.broadcast %cst_19 : f32 to vector<1x256xf32>
    %56 = arith.select %46, %54, %55 : vector<1x256xi1>, vector<1x256xf32>
    %c81_i32 = arith.constant 81 : i32
    %57 = vector.broadcast %c81_i32 : i32 to vector<1x256xi32>
    %58 = arith.muli %16, %57 : vector<1x256xi32>
    %c9_i32 = arith.constant 9 : i32
    %59 = vector.broadcast %c9_i32 : i32 to vector<1x256xi32>
    %60 = arith.muli %34, %59 : vector<1x256xi32>
    %61 = arith.addi %58, %60 : vector<1x256xi32>
    %62 = arith.addi %61, %52 : vector<1x256xi32>
    %63 = tpu.iota {dimensions = array<i32: 0>} : vector<768x256xi32>
    %64 = vector.broadcast %62 : vector<1x256xi32> to vector<768x256xi32>
    %65 = arith.cmpi eq, %63, %64 : vector<768x256xi32>
    %66 = arith.extui %65 : vector<768x256xi1> to vector<768x256xi32>
    %67 = arith.sitofp %66 : vector<768x256xi32> to vector<768x256xf32>
    %68 = arith.truncf %67 : vector<768x256xf32> to vector<768x256xbf16>
    %c0_20 = arith.constant 0 : index
    %c0_21 = arith.constant 0 : index
    %69 = vector.load %arg2[%c0_20, %c0_21] : memref<128x768xbf16, #tpu.memory_space<vmem>>, vector<128x768xbf16>
    %cst_22 = arith.constant dense<0.000000e+00> : vector<128x256xf32>
    %70 = tpu.matmul %69, %68, %cst_22 {dimension_numbers = #tpu.dot_dimension_numbers<[1], [0], [0], [1], [0, 0, 1, 1], [], []>} : vector<128x768xbf16>, vector<768x256xbf16>, vector<128x256xf32> -> vector<128x256xf32>
    %71 = vector.extract_strided_slice %70 {offsets = [0, 0], sizes = [64, 256], strides = [1, 1]} : vector<128x256xf32> to vector<64x256xf32>
    %72 = vector.extract_strided_slice %70 {offsets = [64, 0], sizes = [64, 256], strides = [1, 1]} : vector<128x256xf32> to vector<64x256xf32>
    %73 = arith.addf %71, %72 : vector<64x256xf32>
    %cst_23 = arith.constant 1.000000e+00 : f32
    %74 = vector.broadcast %cst_23 : f32 to vector<1x256xf32>
    %75 = arith.subf %74, %17 : vector<1x256xf32>
    %cst_24 = arith.constant 1.000000e+00 : f32
    %76 = vector.broadcast %cst_24 : f32 to vector<1x256xf32>
    %77 = arith.subf %76, %35 : vector<1x256xf32>
    %78 = arith.mulf %75, %77 : vector<1x256xf32>
    %cst_25 = arith.constant 1.000000e+00 : f32
    %79 = vector.broadcast %cst_25 : f32 to vector<1x256xf32>
    %80 = arith.subf %79, %17 : vector<1x256xf32>
    %81 = arith.mulf %80, %35 : vector<1x256xf32>
    %cst_26 = arith.constant 1.000000e+00 : f32
    %82 = vector.broadcast %cst_26 : f32 to vector<1x256xf32>
    %83 = arith.subf %82, %35 : vector<1x256xf32>
    %84 = arith.mulf %17, %83 : vector<1x256xf32>
    %85 = arith.mulf %17, %35 : vector<1x256xf32>
    %cst_27 = arith.constant 1.000000e+00 : f32
    %86 = vector.broadcast %cst_27 : f32 to vector<1x256xf32>
    %87 = arith.subf %86, %53 : vector<1x256xf32>
    %88 = arith.mulf %87, %56 : vector<1x256xf32>
    %89 = arith.mulf %53, %56 : vector<1x256xf32>
    %90 = arith.mulf %78, %88 : vector<1x256xf32>
    %91 = vector.extract_strided_slice %73 {offsets = [0, 0], sizes = [8, 256], strides = [1, 1]} : vector<64x256xf32> to vector<8x256xf32>
    %92 = vector.broadcast %90 : vector<1x256xf32> to vector<8x256xf32>
    %93 = arith.mulf %92, %91 : vector<8x256xf32>
    %94 = arith.mulf %78, %89 : vector<1x256xf32>
    %95 = vector.extract_strided_slice %73 {offsets = [8, 0], sizes = [8, 256], strides = [1, 1]} : vector<64x256xf32> to vector<8x256xf32>
    %96 = vector.broadcast %94 : vector<1x256xf32> to vector<8x256xf32>
    %97 = arith.mulf %96, %95 : vector<8x256xf32>
    %98 = arith.addf %93, %97 : vector<8x256xf32>
    %99 = arith.mulf %81, %88 : vector<1x256xf32>
    %100 = vector.extract_strided_slice %73 {offsets = [16, 0], sizes = [8, 256], strides = [1, 1]} : vector<64x256xf32> to vector<8x256xf32>
    %101 = vector.broadcast %99 : vector<1x256xf32> to vector<8x256xf32>
    %102 = arith.mulf %101, %100 : vector<8x256xf32>
    %103 = arith.addf %98, %102 : vector<8x256xf32>
    %104 = arith.mulf %81, %89 : vector<1x256xf32>
    %105 = vector.extract_strided_slice %73 {offsets = [24, 0], sizes = [8, 256], strides = [1, 1]} : vector<64x256xf32> to vector<8x256xf32>
    %106 = vector.broadcast %104 : vector<1x256xf32> to vector<8x256xf32>
    %107 = arith.mulf %106, %105 : vector<8x256xf32>
    %108 = arith.addf %103, %107 : vector<8x256xf32>
    %109 = arith.mulf %84, %88 : vector<1x256xf32>
    %110 = vector.extract_strided_slice %73 {offsets = [32, 0], sizes = [8, 256], strides = [1, 1]} : vector<64x256xf32> to vector<8x256xf32>
    %111 = vector.broadcast %109 : vector<1x256xf32> to vector<8x256xf32>
    %112 = arith.mulf %111, %110 : vector<8x256xf32>
    %113 = arith.addf %108, %112 : vector<8x256xf32>
    %114 = arith.mulf %84, %89 : vector<1x256xf32>
    %115 = vector.extract_strided_slice %73 {offsets = [40, 0], sizes = [8, 256], strides = [1, 1]} : vector<64x256xf32> to vector<8x256xf32>
    %116 = vector.broadcast %114 : vector<1x256xf32> to vector<8x256xf32>
    %117 = arith.mulf %116, %115 : vector<8x256xf32>
    %118 = arith.addf %113, %117 : vector<8x256xf32>
    %119 = arith.mulf %85, %88 : vector<1x256xf32>
    %120 = vector.extract_strided_slice %73 {offsets = [48, 0], sizes = [8, 256], strides = [1, 1]} : vector<64x256xf32> to vector<8x256xf32>
    %121 = vector.broadcast %119 : vector<1x256xf32> to vector<8x256xf32>
    %122 = arith.mulf %121, %120 : vector<8x256xf32>
    %123 = arith.addf %118, %122 : vector<8x256xf32>
    %124 = arith.mulf %85, %89 : vector<1x256xf32>
    %125 = vector.extract_strided_slice %73 {offsets = [56, 0], sizes = [8, 256], strides = [1, 1]} : vector<64x256xf32> to vector<8x256xf32>
    %126 = vector.broadcast %124 : vector<1x256xf32> to vector<8x256xf32>
    %127 = arith.mulf %126, %125 : vector<8x256xf32>
    %128 = arith.addf %123, %127 : vector<8x256xf32>
    %c0_28 = arith.constant 0 : index
    %c0_29 = arith.constant 0 : index
    %129 = vector.load %arg3[%c0_28, %c0_29] : memref<8x256xf32, #tpu.memory_space<vmem>>, vector<8x256xf32>
    tpu.vector_store %arg3[%c0_28, %c0_29], %128 {strides = array<i32>} : memref<8x256xf32, #tpu.memory_space<vmem>>, vector<8x256xf32>,
    return
  }
  func.func @transform_0(%arg0: i32) -> (i32, i32) {
    %c0_i32 = arith.constant 0 : i32
    %c0_i32_0 = arith.constant 0 : i32
    return %c0_i32, %arg0 : i32, i32
  }
  func.func @transform_1(%arg0: i32) -> (i32, i32) {
    %c0_i32 = arith.constant 0 : i32
    %c0_i32_0 = arith.constant 0 : i32
    %c0_i32_1 = arith.constant 0 : i32
    return %c0_i32, %c0_i32_0 : i32, i32
  }
  func.func @transform_2(%arg0: i32) -> (i32, i32) {
    %c0_i32 = arith.constant 0 : i32
    %c0_i32_0 = arith.constant 0 : i32
    return %c0_i32, %arg0 : i32, i32
  }
}

</mosaic_0001>

<llo_original>
// kernel: tpu_custom_call.1
$region0: #{tpu_custom_call.1}
  #allocation0 [shape = 'u32[]', space=smem, size = 0x4, offset = 0x4, fixed_abs, tag = 'smem constant byte address 0x4 - core index']
  #allocation1 [shape = 'u32[144,128]{1,0:T(1,128)}', space=vmem, size = 0x12000, scoped, tag = 'internal scratch']
  %s0 = inlined_call_operand.hbm [shape: f32[8,256], index: 0, kind: input, shape index: {}]
  %s1 = inlined_call_operand.hbm [shape: bf16[128,768], index: 1, kind: input, shape index: {}]
  %s2 = inlined_call_operand.hbm [shape: f32[8,256], index: 2, kind: output, shape index: {}]
  %s3 = sld [smem:[#allocation0]]
  $region26: #{tpu_custom_call.1} parent=0
    _
  %s5 = ssub.s32 1, %s3
  %s6 = scalar_select 0, %s5, %s3
  $region1: #{tpu_custom_call.1} parent=0
    #allocation2 [shape = 'u8[8192]{0}', space=vmem, size = 0x2000, scoped, tag = 'input window, operand 0, single buffered']
    #allocation3 [shape = 's32[1]{0}', space=sflag, size = 0x4, scoped, tag = 'scoped memory for tpu_custom_call.1']
    #allocation4 [shape = 's32[1]{0}', space=sflag, size = 0x4, scoped, tag = 'scoped memory for tpu_custom_call.1']
    #allocation5 [shape = 'u8[196608]{0}', space=vmem, size = 0x30000, scoped, tag = 'input window, operand 1, single buffered']
    #allocation6 [shape = 's32[1]{0}', space=sflag, size = 0x4, scoped, tag = 'scoped memory for tpu_custom_call.1']
    #allocation7 [shape = 'u8[8192]{0}', space=vmem, size = 0x2000, scoped, tag = 'output window, operand 0, single buffered']
    %7 = vsyncpa [#allocation3], 0
    %8 = vsyncpa [#allocation6], 0
    %9 = vsyncpa [#allocation4], 0
    // Predicated region
    $region2: #{tpu_custom_call.1} parent=1 // pred_check
      _
    $region3: #{tpu_custom_call.1} parent=1 // pred_check_branch
      %11 = sbr.rel (0) target = $region5
    $region4: #{tpu_custom_call.1} parent=1 // pred_region
      %s13 = ssub.s32 256, 256
      %14 = vsyncadd [#allocation3], %s13
      %s16 = sshll.u32 [#allocation2], 4
      %s17 = int_to_ptr.vmem [resolvable:$true] %s16
      %19 = dma.hbm_to_vmem [thread:$0]  %s0, 256, %s17, [#allocation3]
    $region5: #{tpu_custom_call.1} parent=1 // pred_fallthru
      _
    // Predicated region
    $region6: #{tpu_custom_call.1} parent=1 // pred_check
      _
    $region7: #{tpu_custom_call.1} parent=1 // pred_check_branch
      %21 = sbr.rel (0) target = $region9
    $region8: #{tpu_custom_call.1} parent=1 // pred_region
      %s23 = ssub.s32 6144, 6144
      %24 = vsyncadd [#allocation6], %s23
      %s25 = sshll.u32 [#allocation5], 4
      %s26 = int_to_ptr.vmem [resolvable:$true] %s25
      %31 = dma.hbm_to_vmem [thread:$0]  %s1, 6144, %s26, [#allocation6], 384, 384, 24
    $region9: #{tpu_custom_call.1} parent=1 // pred_fallthru
      _
    // Predicated region
    $region10: #{tpu_custom_call.1} parent=1 // pred_check
      _
    $region11: #{tpu_custom_call.1} parent=1 // pred_check_branch
      %33 = sbr.rel (0) target = $region13
    $region12: #{tpu_custom_call.1} parent=1 // pred_region
      %34 = dma.done [#allocation3], 256
    $region13: #{tpu_custom_call.1} parent=1 // pred_fallthru
      _
    // Predicated region
    $region14: #{tpu_custom_call.1} parent=1 // pred_check
      _
    $region15: #{tpu_custom_call.1} parent=1 // pred_check_branch
      %36 = sbr.rel (0) target = $region17
    $region16: #{tpu_custom_call.1} parent=1 // pred_region
      %37 = dma.done [#allocation6], 6144
    $region17: #{tpu_custom_call.1} parent=1 // pred_fallthru
      _
    %v38 = vld [vmem:[#allocation2] sm:$0xff]
    %v39 = vld [vmem:[#allocation2 + $0x8] sm:$0xff]
    %v40 = vsub.f32 %v38, -1.0
    %v41 = vsub.f32 %v39, -1.0
    %v42 = vmul.f32 %v40, 4.0
    %v43 = vmul.f32 %v41, 4.0
    %vm44 = vcmp.ge.f32.partialorder %v38, -1.0
    %vm45 = vcmp.ge.f32.partialorder %v39, -1.0
    %vm46 = vcmp.le.f32.partialorder %v38, 1.0
    %vm47 = vcmp.le.f32.partialorder %v39, 1.0
    %vm48 = vmand %vm44, %vm46
    %vm49 = vmand %vm45, %vm47
    %v50 = vfloor.f32 %v42
    %v51 = vfloor.f32 %v43
    %v52 = vmax.f32 %v50, 0.0
    %v53 = vmax.f32 %v51, 0.0
    %v54 = vmin.f32 %v52, 7.0
    %v55 = vmin.f32 %v53, 7.0
    %v56 = vcvt.f32.s32.to.zero.pseudo %v54
    %v57 = vcvt.f32.s32.to.zero.pseudo %v55
    %v58 = vsub.f32 %v42, %v54
    %v59 = vsub.f32 %v43, %v55
    %v60 = vsel %vm48, 1, 0
    %v61 = vsel %vm49, 1, 0
    %v62 = vrot.slane %v60, 1
    %v63 = vrot.slane %v61, 1
    %vm64 = vcmp.ne.s32.totalorder %v62, 0
    %vm65 = vcmp.ne.s32.totalorder %v63, 0
    %vm66 = vmand %vm48, %vm64
    %vm67 = vmand %vm49, %vm65
    %v68 = vrot.slane %v60, 2
    %v69 = vrot.slane %v61, 2
    %vm70 = vcmp.ne.s32.totalorder %v68, 0
    %vm71 = vcmp.ne.s32.totalorder %v69, 0
    %vm72 = vmand %vm66, %vm70
    %vm73 = vmand %vm67, %vm71
    %v74 = vsel %vm72, 1.0, 0.0
    %v75 = vsel %vm73, 1.0, 0.0
    %v76 = vmul.u32 %v56, 81
    %v77 = vmul.u32 %v57, 81
    %v78 = vmul.u32 %v56, 9
    %v79 = vmul.u32 %v57, 9
    %v80 = vrot.slane %v78, 1
    %v81 = vrot.slane %v79, 1
    %v82 = vadd.s32 %v76, %v80
    %v83 = vadd.s32 %v77, %v81
    %v84 = vrot.slane %v56, 2
    %v85 = vrot.slane %v57, 2
    %v86 = vadd.s32 %v82, %v84
    %v87 = vadd.s32 %v83, %v85
    %v88 = vlaneseq
    %v89 = vshrl.u32 %v88, 7
    %v90 = vadd.s32 %v89, 8
    %v91 = vadd.s32 %v89, 16
    %v92 = vadd.s32 %v89, 24
    %v93 = vadd.s32 %v89, 32
    %v94 = vadd.s32 %v89, 40
    %v95 = vadd.s32 %v89, 48
    %v96 = vadd.s32 %v89, 56
    %v97 = vadd.s32 %v89, 64
    %v98 = vadd.s32 %v89, 72
    %v99 = vadd.s32 %v89, 80
    %v100 = vadd.s32 %v89, 88
    %v101 = vadd.s32 %v89, 96
    %v102 = vadd.s32 %v89, 104
    %v103 = vadd.s32 %v89, 112
    %v104 = vadd.s32 %v89, 120
    %v105 = vadd.s32 %v89, 128
    %v106 = vadd.s32 %v89, 136
    %v107 = vadd.s32 %v89, 144
    %v108 = vadd.s32 %v89, 152
    %v109 = vadd.s32 %v89, 160
    %v110 = vadd.s32 %v89, 168
    %v111 = vadd.s32 %v89, 176
    %v112 = vadd.s32 %v89, 184
    %v113 = vadd.s32 %v89, 192
    %v114 = vadd.s32 %v89, 200
    %v115 = vadd.s32 %v89, 208
    %v116 = vadd.s32 %v89, 216
    %v117 = vadd.s32 %v89, 224
    %v118 = vadd.s32 %v89, 232
    %v119 = vadd.s32 %v89, 240
    %v120 = vadd.s32 %v89, 248
    %v121 = vadd.s32 %v89, 256
    %v122 = vadd.s32 %v89, 264
    %v123 = vadd.s32 %v89, 272
    %v124 = vadd.s32 %v89, 280
    %v125 = vadd.s32 %v89, 288
    %v126 = vadd.s32 %v89, 296
    %v127 = vadd.s32 %v89, 304
    %v128 = vadd.s32 %v89, 312
    %v129 = vadd.s32 %v89, 320
    %v130 = vadd.s32 %v89, 328
    %v131 = vadd.s32 %v89, 336
    %v132 = vadd.s32 %v89, 344
    %v133 = vadd.s32 %v89, 352
    %v134 = vadd.s32 %v89, 360
    %v135 = vadd.s32 %v89, 368
    %v136 = vadd.s32 %v89, 376
    %v137 = vadd.s32 %v89, 384
    %v138 = vadd.s32 %v89, 392
    %v139 = vadd.s32 %v89, 400
    %v140 = vadd.s32 %v89, 408
    %v141 = vadd.s32 %v89, 416
    %v142 = vadd.s32 %v89, 424
    %v143 = vadd.s32 %v89, 432
    %v144 = vadd.s32 %v89, 440
    %v145 = vadd.s32 %v89, 448
    %v146 = vadd.s32 %v89, 456
    %v147 = vadd.s32 %v89, 464
    %v148 = vadd.s32 %v89, 472
    %v149 = vadd.s32 %v89, 480
    %v150 = vadd.s32 %v89, 488
    %v151 = vadd.s32 %v89, 496
    %v152 = vadd.s32 %v89, 504
    %v153 = vadd.s32 %v89, 512
    %v154 = vadd.s32 %v89, 520
    %v155 = vadd.s32 %v89, 528
    %v156 = vadd.s32 %v89, 536
    %v157 = vadd.s32 %v89, 544
    %v158 = vadd.s32 %v89, 552
    %v159 = vadd.s32 %v89, 560
    %v160 = vadd.s32 %v89, 568
    %v161 = vadd.s32 %v89, 576
    %v162 = vadd.s32 %v89, 584
    %v163 = vadd.s32 %v89, 592
    %v164 = vadd.s32 %v89, 600
    %v165 = vadd.s32 %v89, 608
    %v166 = vadd.s32 %v89, 616
    %v167 = vadd.s32 %v89, 624
    %v168 = vadd.s32 %v89, 632
    %v169 = vadd.s32 %v89, 640
    %v170 = vadd.s32 %v89, 648
    %v171 = vadd.s32 %v89, 656
    %v172 = vadd.s32 %v89, 664
    %v173 = vadd.s32 %v89, 672
    %v174 = vadd.s32 %v89, 680
    %v175 = vadd.s32 %v89, 688
    %v176 = vadd.s32 %v89, 696
    %v177 = vadd.s32 %v89, 704
    %v178 = vadd.s32 %v89, 712
    %v179 = vadd.s32 %v89, 720
    %v180 = vadd.s32 %v89, 728
    %v181 = vadd.s32 %v89, 736
    %v182 = vadd.s32 %v89, 744
    %v183 = vadd.s32 %v89, 752
    %v184 = vadd.s32 %v89, 760
    %v185 = vlaneseq
    %v186 = vshrl.u32 %v185, 7
    %v187 = vsub.s32 0, %v186
    %v188 = vrot.slane %v86, %v187
    %v189 = vlaneseq
    %v190 = vshrl.u32 %v189, 7
    %v191 = vsub.s32 0, %v190
    %v192 = vrot.slane %v87, %v191
    %vm193 = vcmp.eq.s32.totalorder %v89, %v188
    %vm194 = vcmp.eq.s32.totalorder %v89, %v192
    %vm195 = vcmp.eq.s32.totalorder %v90, %v188
    %vm196 = vcmp.eq.s32.totalorder %v90, %v192
    %vm197 = vcmp.eq.s32.totalorder %v91, %v188
    %vm198 = vcmp.eq.s32.totalorder %v91, %v192
    %vm199 = vcmp.eq.s32.totalorder %v92, %v188
    %vm200 = vcmp.eq.s32.totalorder %v92, %v192
    %vm201 = vcmp.eq.s32.totalorder %v93, %v188
    %vm202 = vcmp.eq.s32.totalorder %v93, %v192
    %vm203 = vcmp.eq.s32.totalorder %v94, %v188
    %vm204 = vcmp.eq.s32.totalorder %v94, %v192
    %vm205 = vcmp.eq.s32.totalorder %v95, %v188
    %vm206 = vcmp.eq.s32.totalorder %v95, %v192
    %vm207 = vcmp.eq.s32.totalorder %v96, %v188
    %vm208 = vcmp.eq.s32.totalorder %v96, %v192
    %vm209 = vcmp.eq.s32.totalorder %v97, %v188
    %vm210 = vcmp.eq.s32.totalorder %v97, %v192
    %vm211 = vcmp.eq.s32.totalorder %v98, %v188
    %vm212 = vcmp.eq.s32.totalorder %v98, %v192
    %vm213 = vcmp.eq.s32.totalorder %v99, %v188
    %vm214 = vcmp.eq.s32.totalorder %v99, %v192
    %vm215 = vcmp.eq.s32.totalorder %v100, %v188
    %vm216 = vcmp.eq.s32.totalorder %v100, %v192
    %vm217 = vcmp.eq.s32.totalorder %v101, %v188
    %vm218 = vcmp.eq.s32.totalorder %v101, %v192
    %vm219 = vcmp.eq.s32.totalorder %v102, %v188
    %vm220 = vcmp.eq.s32.totalorder %v102, %v192
    %vm221 = vcmp.eq.s32.totalorder %v103, %v188
    %vm222 = vcmp.eq.s32.totalorder %v103, %v192
    %vm223 = vcmp.eq.s32.totalorder %v104, %v188
    %vm224 = vcmp.eq.s32.totalorder %v104, %v192
    %vm225 = vcmp.eq.s32.totalorder %v105, %v188
    %vm226 = vcmp.eq.s32.totalorder %v105, %v192
    %vm227 = vcmp.eq.s32.totalorder %v106, %v188
    %vm228 = vcmp.eq.s32.totalorder %v106, %v192
    %vm229 = vcmp.eq.s32.totalorder %v107, %v188
    %vm230 = vcmp.eq.s32.totalorder %v107, %v192
    %vm231 = vcmp.eq.s32.totalorder %v108, %v188
    %vm232 = vcmp.eq.s32.totalorder %v108, %v192
    %vm233 = vcmp.eq.s32.totalorder %v109, %v188
    %vm234 = vcmp.eq.s32.totalorder %v109, %v192
    %vm235 = vcmp.eq.s32.totalorder %v110, %v188
    %vm236 = vcmp.eq.s32.totalorder %v110, %v192
    %vm237 = vcmp.eq.s32.totalorder %v111, %v188
    %vm238 = vcmp.eq.s32.totalorder %v111, %v192
    %vm239 = vcmp.eq.s32.totalorder %v112, %v188
    %vm240 = vcmp.eq.s32.totalorder %v112, %v192
    %vm241 = vcmp.eq.s32.totalorder %v113, %v188
    %vm242 = vcmp.eq.s32.totalorder %v113, %v192
    %vm243 = vcmp.eq.s32.totalorder %v114, %v188
    %vm244 = vcmp.eq.s32.totalorder %v114, %v192
    %vm245 = vcmp.eq.s32.totalorder %v115, %v188
    %vm246 = vcmp.eq.s32.totalorder %v115, %v192
    %vm247 = vcmp.eq.s32.totalorder %v116, %v188
    %vm248 = vcmp.eq.s32.totalorder %v116, %v192
    %vm249 = vcmp.eq.s32.totalorder %v117, %v188
    %vm250 = vcmp.eq.s32.totalorder %v117, %v192
    %vm251 = vcmp.eq.s32.totalorder %v118, %v188
    %vm252 = vcmp.eq.s32.totalorder %v118, %v192
    %vm253 = vcmp.eq.s32.totalorder %v119, %v188
    %vm254 = vcmp.eq.s32.totalorder %v119, %v192
    %vm255 = vcmp.eq.s32.totalorder %v120, %v188
    %vm256 = vcmp.eq.s32.totalorder %v120, %v192
    %vm257 = vcmp.eq.s32.totalorder %v121, %v188
    %vm258 = vcmp.eq.s32.totalorder %v121, %v192
    %vm259 = vcmp.eq.s32.totalorder %v122, %v188
    %vm260 = vcmp.eq.s32.totalorder %v122, %v192
    %vm261 = vcmp.eq.s32.totalorder %v123, %v188
    %vm262 = vcmp.eq.s32.totalorder %v123, %v192
    %vm263 = vcmp.eq.s32.totalorder %v124, %v188
    %vm264 = vcmp.eq.s32.totalorder %v124, %v192
    %vm265 = vcmp.eq.s32.totalorder %v125, %v188
    %vm266 = vcmp.eq.s32.totalorder %v125, %v192
    %vm267 = vcmp.eq.s32.totalorder %v126, %v188
    %vm268 = vcmp.eq.s32.totalorder %v126, %v192
    %vm269 = vcmp.eq.s32.totalorder %v127, %v188
    %vm270 = vcmp.eq.s32.totalorder %v127, %v192
    %vm271 = vcmp.eq.s32.totalorder %v128, %v188
    %vm272 = vcmp.eq.s32.totalorder %v128, %v192
    %vm273 = vcmp.eq.s32.totalorder %v129, %v188
    %vm274 = vcmp.eq.s32.totalorder %v129, %v192
    %vm275 = vcmp.eq.s32.totalorder %v130, %v188
    %vm276 = vcmp.eq.s32.totalorder %v130, %v192
    %vm277 = vcmp.eq.s32.totalorder %v131, %v188
    %vm278 = vcmp.eq.s32.totalorder %v131, %v192
    %vm279 = vcmp.eq.s32.totalorder %v132, %v188
    %vm280 = vcmp.eq.s32.totalorder %v132, %v192
    %vm281 = vcmp.eq.s32.totalorder %v133, %v188
    %vm282 = vcmp.eq.s32.totalorder %v133, %v192
    %vm283 = vcmp.eq.s32.totalorder %v134, %v188
    %vm284 = vcmp.eq.s32.totalorder %v134, %v192
    %vm285 = vcmp.eq.s32.totalorder %v135, %v188
    %vm286 = vcmp.eq.s32.totalorder %v135, %v192
    %vm287 = vcmp.eq.s32.totalorder %v136, %v188
    %vm288 = vcmp.eq.s32.totalorder %v136, %v192
    %vm289 = vcmp.eq.s32.totalorder %v137, %v188
    %vm290 = vcmp.eq.s32.totalorder %v137, %v192
    %vm291 = vcmp.eq.s32.totalorder %v138, %v188
    %vm292 = vcmp.eq.s32.totalorder %v138, %v192
    %vm293 = vcmp.eq.s32.totalorder %v139, %v188
    %vm294 = vcmp.eq.s32.totalorder %v139, %v192
    %vm295 = vcmp.eq.s32.totalorder %v140, %v188
    %vm296 = vcmp.eq.s32.totalorder %v140, %v192
    %vm297 = vcmp.eq.s32.totalorder %v141, %v188
    %vm298 = vcmp.eq.s32.totalorder %v141, %v192
    %vm299 = vcmp.eq.s32.totalorder %v142, %v188
    %vm300 = vcmp.eq.s32.totalorder %v142, %v192
    %vm301 = vcmp.eq.s32.totalorder %v143, %v188
    %vm302 = vcmp.eq.s32.totalorder %v143, %v192
    %vm303 = vcmp.eq.s32.totalorder %v144, %v188
    %vm304 = vcmp.eq.s32.totalorder %v144, %v192
    %vm305 = vcmp.eq.s32.totalorder %v145, %v188
    %vm306 = vcmp.eq.s32.totalorder %v145, %v192
    %vm307 = vcmp.eq.s32.totalorder %v146, %v188
    %vm308 = vcmp.eq.s32.totalorder %v146, %v192
    %vm309 = vcmp.eq.s32.totalorder %v147, %v188
    %vm310 = vcmp.eq.s32.totalorder %v147, %v192
    %vm311 = vcmp.eq.s32.totalorder %v148, %v188
    %vm312 = vcmp.eq.s32.totalorder %v148, %v192
    %vm313 = vcmp.eq.s32.totalorder %v149, %v188
    %vm314 = vcmp.eq.s32.totalorder %v149, %v192
    %vm315 = vcmp.eq.s32.totalorder %v150, %v188
    %vm316 = vcmp.eq.s32.totalorder %v150, %v192
    %vm317 = vcmp.eq.s32.totalorder %v151, %v188
    %vm318 = vcmp.eq.s32.totalorder %v151, %v192
    %vm319 = vcmp.eq.s32.totalorder %v152, %v188
    %vm320 = vcmp.eq.s32.totalorder %v152, %v192
    %vm321 = vcmp.eq.s32.totalorder %v153, %v188
    %vm322 = vcmp.eq.s32.totalorder %v153, %v192
    %vm323 = vcmp.eq.s32.totalorder %v154, %v188
    %vm324 = vcmp.eq.s32.totalorder %v154, %v192
    %vm325 = vcmp.eq.s32.totalorder %v155, %v188
    %vm326 = vcmp.eq.s32.totalorder %v155, %v192
    %vm327 = vcmp.eq.s32.totalorder %v156, %v188
    %vm328 = vcmp.eq.s32.totalorder %v156, %v192
    %vm329 = vcmp.eq.s32.totalorder %v157, %v188
    %vm330 = vcmp.eq.s32.totalorder %v157, %v192
    %vm331 = vcmp.eq.s32.totalorder %v158, %v188
    %vm332 = vcmp.eq.s32.totalorder %v158, %v192
    %vm333 = vcmp.eq.s32.totalorder %v159, %v188
    %vm334 = vcmp.eq.s32.totalorder %v159, %v192
    %vm335 = vcmp.eq.s32.totalorder %v160, %v188
    %vm336 = vcmp.eq.s32.totalorder %v160, %v192
    %vm337 = vcmp.eq.s32.totalorder %v161, %v188
    %vm338 = vcmp.eq.s32.totalorder %v161, %v192
    %vm339 = vcmp.eq.s32.totalorder %v162, %v188
    %vm340 = vcmp.eq.s32.totalorder %v162, %v192
    %vm341 = vcmp.eq.s32.totalorder %v163, %v188
    %vm342 = vcmp.eq.s32.totalorder %v163, %v192
    %vm343 = vcmp.eq.s32.totalorder %v164, %v188
    %vm344 = vcmp.eq.s32.totalorder %v164, %v192
    %vm345 = vcmp.eq.s32.totalorder %v165, %v188
    %vm346 = vcmp.eq.s32.totalorder %v165, %v192
    %vm347 = vcmp.eq.s32.totalorder %v166, %v188
    %vm348 = vcmp.eq.s32.totalorder %v166, %v192
    %vm349 = vcmp.eq.s32.totalorder %v167, %v188
    %vm350 = vcmp.eq.s32.totalorder %v167, %v192
    %vm351 = vcmp.eq.s32.totalorder %v168, %v188
    %vm352 = vcmp.eq.s32.totalorder %v168, %v192
    %vm353 = vcmp.eq.s32.totalorder %v169, %v188
    %vm354 = vcmp.eq.s32.totalorder %v169, %v192
    %vm355 = vcmp.eq.s32.totalorder %v170, %v188
    %vm356 = vcmp.eq.s32.totalorder %v170, %v192
    %vm357 = vcmp.eq.s32.totalorder %v171, %v188
    %vm358 = vcmp.eq.s32.totalorder %v171, %v192
    %vm359 = vcmp.eq.s32.totalorder %v172, %v188
    %vm360 = vcmp.eq.s32.totalorder %v172, %v192
    %vm361 = vcmp.eq.s32.totalorder %v173, %v188
    %vm362 = vcmp.eq.s32.totalorder %v173, %v192
    %vm363 = vcmp.eq.s32.totalorder %v174, %v188
    %vm364 = vcmp.eq.s32.totalorder %v174, %v192
    %vm365 = vcmp.eq.s32.totalorder %v175, %v188
    %vm366 = vcmp.eq.s32.totalorder %v175, %v192
    %vm367 = vcmp.eq.s32.totalorder %v176, %v188
    %vm368 = vcmp.eq.s32.totalorder %v176, %v192
    %vm369 = vcmp.eq.s32.totalorder %v177, %v188
    %vm370 = vcmp.eq.s32.totalorder %v177, %v192
    %vm371 = vcmp.eq.s32.totalorder %v178, %v188
    %vm372 = vcmp.eq.s32.totalorder %v178, %v192
    %vm373 = vcmp.eq.s32.totalorder %v179, %v188
    %vm374 = vcmp.eq.s32.totalorder %v179, %v192
    %vm375 = vcmp.eq.s32.totalorder %v180, %v188
    %vm376 = vcmp.eq.s32.totalorder %v180, %v192
    %vm377 = vcmp.eq.s32.totalorder %v181, %v188
    %vm378 = vcmp.eq.s32.totalorder %v181, %v192
    %vm379 = vcmp.eq.s32.totalorder %v182, %v188
    %vm380 = vcmp.eq.s32.totalorder %v182, %v192
    %vm381 = vcmp.eq.s32.totalorder %v183, %v188
    %vm382 = vcmp.eq.s32.totalorder %v183, %v192
    %vm383 = vcmp.eq.s32.totalorder %v184, %v188
    %vm384 = vcmp.eq.s32.totalorder %v184, %v192
    %v385 = vsel %vm193, 1, 0
    %v386 = vsel %vm194, 1, 0
    %v387 = vsel %vm195, 1, 0
    %v388 = vsel %vm196, 1, 0
    %v389 = vsel %vm197, 1, 0
    %v390 = vsel %vm198, 1, 0
    %v391 = vsel %vm199, 1, 0
    %v392 = vsel %vm200, 1, 0
    %v393 = vsel %vm201, 1, 0
    %v394 = vsel %vm202, 1, 0
    %v395 = vsel %vm203, 1, 0
    %v396 = vsel %vm204, 1, 0
    %v397 = vsel %vm205, 1, 0
    %v398 = vsel %vm206, 1, 0
    %v399 = vsel %vm207, 1, 0
    %v400 = vsel %vm208, 1, 0
    %v401 = vsel %vm209, 1, 0
    %v402 = vsel %vm210, 1, 0
    %v403 = vsel %vm211, 1, 0
    %v404 = vsel %vm212, 1, 0
    %v405 = vsel %vm213, 1, 0
    %v406 = vsel %vm214, 1, 0
    %v407 = vsel %vm215, 1, 0
    %v408 = vsel %vm216, 1, 0
    %v409 = vsel %vm217, 1, 0
    %v410 = vsel %vm218, 1, 0
    %v411 = vsel %vm219, 1, 0
    %v412 = vsel %vm220, 1, 0
    %v413 = vsel %vm221, 1, 0
    %v414 = vsel %vm222, 1, 0
    %v415 = vsel %vm223, 1, 0
    %v416 = vsel %vm224, 1, 0
    %v417 = vsel %vm225, 1, 0
    %v418 = vsel %vm226, 1, 0
    %v419 = vsel %vm227, 1, 0
    %v420 = vsel %vm228, 1, 0
    %v421 = vsel %vm229, 1, 0
    %v422 = vsel %vm230, 1, 0
    %v423 = vsel %vm231, 1, 0
    %v424 = vsel %vm232, 1, 0
    %v425 = vsel %vm233, 1, 0
    %v426 = vsel %vm234, 1, 0
    %v427 = vsel %vm235, 1, 0
    %v428 = vsel %vm236, 1, 0
    %v429 = vsel %vm237, 1, 0
    %v430 = vsel %vm238, 1, 0
    %v431 = vsel %vm239, 1, 0
    %v432 = vsel %vm240, 1, 0
    %v433 = vsel %vm241, 1, 0
    %v434 = vsel %vm242, 1, 0
    %v435 = vsel %vm243, 1, 0
    %v436 = vsel %vm244, 1, 0
    %v437 = vsel %vm245, 1, 0
    %v438 = vsel %vm246, 1, 0
    %v439 = vsel %vm247, 1, 0
    %v440 = vsel %vm248, 1, 0
    %v441 = vsel %vm249, 1, 0
    %v442 = vsel %vm250, 1, 0
    %v443 = vsel %vm251, 1, 0
    %v444 = vsel %vm252, 1, 0
    %v445 = vsel %vm253, 1, 0
    %v446 = vsel %vm254, 1, 0
    %v447 = vsel %vm255, 1, 0
    %v448 = vsel %vm256, 1, 0
    %v449 = vsel %vm257, 1, 0
    %v450 = vsel %vm258, 1, 0
    %v451 = vsel %vm259, 1, 0
    %v452 = vsel %vm260, 1, 0
    %v453 = vsel %vm261, 1, 0
    %v454 = vsel %vm262, 1, 0
    %v455 = vsel %vm263, 1, 0
    %v456 = vsel %vm264, 1, 0
    %v457 = vsel %vm265, 1, 0
    %v458 = vsel %vm266, 1, 0
    %v459 = vsel %vm267, 1, 0
    %v460 = vsel %vm268, 1, 0
    %v461 = vsel %vm269, 1, 0
    %v462 = vsel %vm270, 1, 0
    %v463 = vsel %vm271, 1, 0
    %v464 = vsel %vm272, 1, 0
    %v465 = vsel %vm273, 1, 0
    %v466 = vsel %vm274, 1, 0
    %v467 = vsel %vm275, 1, 0
    %v468 = vsel %vm276, 1, 0
    %v469 = vsel %vm277, 1, 0
    %v470 = vsel %vm278, 1, 0
    %v471 = vsel %vm279, 1, 0
    %v472 = vsel %vm280, 1, 0
    %v473 = vsel %vm281, 1, 0
    %v474 = vsel %vm282, 1, 0
    %v475 = vsel %vm283, 1, 0
    %v476 = vsel %vm284, 1, 0
    %v477 = vsel %vm285, 1, 0
    %v478 = vsel %vm286, 1, 0
    %v479 = vsel %vm287, 1, 0
    %v480 = vsel %vm288, 1, 0
    %v481 = vsel %vm289, 1, 0
    %v482 = vsel %vm290, 1, 0
    %v483 = vsel %vm291, 1, 0
    %v484 = vsel %vm292, 1, 0
    %v485 = vsel %vm293, 1, 0
    %v486 = vsel %vm294, 1, 0
    %v487 = vsel %vm295, 1, 0
    %v488 = vsel %vm296, 1, 0
    %v489 = vsel %vm297, 1, 0
    %v490 = vsel %vm298, 1, 0
    %v491 = vsel %vm299, 1, 0
    %v492 = vsel %vm300, 1, 0
    %v493 = vsel %vm301, 1, 0
    %v494 = vsel %vm302, 1, 0
    %v495 = vsel %vm303, 1, 0
    %v496 = vsel %vm304, 1, 0
    %v497 = vsel %vm305, 1, 0
    %v498 = vsel %vm306, 1, 0
    %v499 = vsel %vm307, 1, 0
    %v500 = vsel %vm308, 1, 0
    %v501 = vsel %vm309, 1, 0
    %v502 = vsel %vm310, 1, 0
    %v503 = vsel %vm311, 1, 0
    %v504 = vsel %vm312, 1, 0
    %v505 = vsel %vm313, 1, 0
    %v506 = vsel %vm314, 1, 0
    %v507 = vsel %vm315, 1, 0
    %v508 = vsel %vm316, 1, 0
    %v509 = vsel %vm317, 1, 0
    %v510 = vsel %vm318, 1, 0
    %v511 = vsel %vm319, 1, 0
    %v512 = vsel %vm320, 1, 0
    %v513 = vsel %vm321, 1, 0
    %v514 = vsel %vm322, 1, 0
    %v515 = vsel %vm323, 1, 0
    %v516 = vsel %vm324, 1, 0
    %v517 = vsel %vm325, 1, 0
    %v518 = vsel %vm326, 1, 0
    %v519 = vsel %vm327, 1, 0
    %v520 = vsel %vm328, 1, 0
    %v521 = vsel %vm329, 1, 0
    %v522 = vsel %vm330, 1, 0
    %v523 = vsel %vm331, 1, 0
    %v524 = vsel %vm332, 1, 0
    %v525 = vsel %vm333, 1, 0
    %v526 = vsel %vm334, 1, 0
    %v527 = vsel %vm335, 1, 0
    %v528 = vsel %vm336, 1, 0
    %v529 = vsel %vm337, 1, 0
    %v530 = vsel %vm338, 1, 0
    %v531 = vsel %vm339, 1, 0
    %v532 = vsel %vm340, 1, 0
    %v533 = vsel %vm341, 1, 0
    %v534 = vsel %vm342, 1, 0
    %v535 = vsel %vm343, 1, 0
    %v536 = vsel %vm344, 1, 0
    %v537 = vsel %vm345, 1, 0
    %v538 = vsel %vm346, 1, 0
    %v539 = vsel %vm347, 1, 0
    %v540 = vsel %vm348, 1, 0
    %v541 = vsel %vm349, 1, 0
    %v542 = vsel %vm350, 1, 0
    %v543 = vsel %vm351, 1, 0
    %v544 = vsel %vm352, 1, 0
    %v545 = vsel %vm353, 1, 0
    %v546 = vsel %vm354, 1, 0
    %v547 = vsel %vm355, 1, 0
    %v548 = vsel %vm356, 1, 0
    %v549 = vsel %vm357, 1, 0
    %v550 = vsel %vm358, 1, 0
    %v551 = vsel %vm359, 1, 0
    %v552 = vsel %vm360, 1, 0
    %v553 = vsel %vm361, 1, 0
    %v554 = vsel %vm362, 1, 0
    %v555 = vsel %vm363, 1, 0
    %v556 = vsel %vm364, 1, 0
    %v557 = vsel %vm365, 1, 0
    %v558 = vsel %vm366, 1, 0
    %v559 = vsel %vm367, 1, 0
    %v560 = vsel %vm368, 1, 0
    %v561 = vsel %vm369, 1, 0
    %v562 = vsel %vm370, 1, 0
    %v563 = vsel %vm371, 1, 0
    %v564 = vsel %vm372, 1, 0
    %v565 = vsel %vm373, 1, 0
    %v566 = vsel %vm374, 1, 0
    %v567 = vsel %vm375, 1, 0
    %v568 = vsel %vm376, 1, 0
    %v569 = vsel %vm377, 1, 0
    %v570 = vsel %vm378, 1, 0
    %v571 = vsel %vm379, 1, 0
    %v572 = vsel %vm380, 1, 0
    %v573 = vsel %vm381, 1, 0
    %v574 = vsel %vm382, 1, 0
    %v575 = vsel %vm383, 1, 0
    %v576 = vsel %vm384, 1, 0
    %v577 = vcvt.s32.f32 %v385
    %v578 = vcvt.s32.f32 %v386
    %v579 = vcvt.s32.f32 %v387
    %v580 = vcvt.s32.f32 %v388
    %v581 = vcvt.s32.f32 %v389
    %v582 = vcvt.s32.f32 %v390
    %v583 = vcvt.s32.f32 %v391
    %v584 = vcvt.s32.f32 %v392
    %v585 = vcvt.s32.f32 %v393
    %v586 = vcvt.s32.f32 %v394
    %v587 = vcvt.s32.f32 %v395
    %v588 = vcvt.s32.f32 %v396
    %v589 = vcvt.s32.f32 %v397
    %v590 = vcvt.s32.f32 %v398
    %v591 = vcvt.s32.f32 %v399
    %v592 = vcvt.s32.f32 %v400
    %v593 = vcvt.s32.f32 %v401
    %v594 = vcvt.s32.f32 %v402
    %v595 = vcvt.s32.f32 %v403
    %v596 = vcvt.s32.f32 %v404
    %v597 = vcvt.s32.f32 %v405
    %v598 = vcvt.s32.f32 %v406
    %v599 = vcvt.s32.f32 %v407
    %v600 = vcvt.s32.f32 %v408
    %v601 = vcvt.s32.f32 %v409
    %v602 = vcvt.s32.f32 %v410
    %v603 = vcvt.s32.f32 %v411
    %v604 = vcvt.s32.f32 %v412
    %v605 = vcvt.s32.f32 %v413
    %v606 = vcvt.s32.f32 %v414
    %v607 = vcvt.s32.f32 %v415
    %v608 = vcvt.s32.f32 %v416
    %v609 = vcvt.s32.f32 %v417
    %v610 = vcvt.s32.f32 %v418
    %v611 = vcvt.s32.f32 %v419
    %v612 = vcvt.s32.f32 %v420
    %v613 = vcvt.s32.f32 %v421
    %v614 = vcvt.s32.f32 %v422
    %v615 = vcvt.s32.f32 %v423
    %v616 = vcvt.s32.f32 %v424
    %v617 = vcvt.s32.f32 %v425
    %v618 = vcvt.s32.f32 %v426
    %v619 = vcvt.s32.f32 %v427
    %v620 = vcvt.s32.f32 %v428
    %v621 = vcvt.s32.f32 %v429
    %v622 = vcvt.s32.f32 %v430
    %v623 = vcvt.s32.f32 %v431
    %v624 = vcvt.s32.f32 %v432
    %v625 = vcvt.s32.f32 %v433
    %v626 = vcvt.s32.f32 %v434
    %v627 = vcvt.s32.f32 %v435
    %v628 = vcvt.s32.f32 %v436
    %v629 = vcvt.s32.f32 %v437
    %v630 = vcvt.s32.f32 %v438
    %v631 = vcvt.s32.f32 %v439
    %v632 = vcvt.s32.f32 %v440
    %v633 = vcvt.s32.f32 %v441
    %v634 = vcvt.s32.f32 %v442
    %v635 = vcvt.s32.f32 %v443
    %v636 = vcvt.s32.f32 %v444
    %v637 = vcvt.s32.f32 %v445
    %v638 = vcvt.s32.f32 %v446
    %v639 = vcvt.s32.f32 %v447
    %v640 = vcvt.s32.f32 %v448
    %v641 = vcvt.s32.f32 %v449
    %v642 = vcvt.s32.f32 %v450
    %v643 = vcvt.s32.f32 %v451
    %v644 = vcvt.s32.f32 %v452
    %v645 = vcvt.s32.f32 %v453
    %v646 = vcvt.s32.f32 %v454
    %v647 = vcvt.s32.f32 %v455
    %v648 = vcvt.s32.f32 %v456
    %v649 = vcvt.s32.f32 %v457
    %v650 = vcvt.s32.f32 %v458
    %v651 = vcvt.s32.f32 %v459
    %v652 = vcvt.s32.f32 %v460
    %v653 = vcvt.s32.f32 %v461
    %v654 = vcvt.s32.f32 %v462
    %v655 = vcvt.s32.f32 %v463
    %v656 = vcvt.s32.f32 %v464
    %v657 = vcvt.s32.f32 %v465
    %v658 = vcvt.s32.f32 %v466
    %v659 = vcvt.s32.f32 %v467
    %v660 = vcvt.s32.f32 %v468
    %v661 = vcvt.s32.f32 %v469
    %v662 = vcvt.s32.f32 %v470
    %v663 = vcvt.s32.f32 %v471
    %v664 = vcvt.s32.f32 %v472
    %v665 = vcvt.s32.f32 %v473
    %v666 = vcvt.s32.f32 %v474
    %v667 = vcvt.s32.f32 %v475
    %v668 = vcvt.s32.f32 %v476
    %v669 = vcvt.s32.f32 %v477
    %v670 = vcvt.s32.f32 %v478
    %v671 = vcvt.s32.f32 %v479
    %v672 = vcvt.s32.f32 %v480
    %v673 = vcvt.s32.f32 %v481
    %v674 = vcvt.s32.f32 %v482
    %v675 = vcvt.s32.f32 %v483
    %v676 = vcvt.s32.f32 %v484
    %v677 = vcvt.s32.f32 %v485
    %v678 = vcvt.s32.f32 %v486
    %v679 = vcvt.s32.f32 %v487
    %v680 = vcvt.s32.f32 %v488
    %v681 = vcvt.s32.f32 %v489
    %v682 = vcvt.s32.f32 %v490
    %v683 = vcvt.s32.f32 %v491
    %v684 = vcvt.s32.f32 %v492
    %v685 = vcvt.s32.f32 %v493
    %v686 = vcvt.s32.f32 %v494
    %v687 = vcvt.s32.f32 %v495
    %v688 = vcvt.s32.f32 %v496
    %v689 = vcvt.s32.f32 %v497
    %v690 = vcvt.s32.f32 %v498
    %v691 = vcvt.s32.f32 %v499
    %v692 = vcvt.s32.f32 %v500
    %v693 = vcvt.s32.f32 %v501
    %v694 = vcvt.s32.f32 %v502
    %v695 = vcvt.s32.f32 %v503
    %v696 = vcvt.s32.f32 %v504
    %v697 = vcvt.s32.f32 %v505
    %v698 = vcvt.s32.f32 %v506
    %v699 = vcvt.s32.f32 %v507
    %v700 = vcvt.s32.f32 %v508
    %v701 = vcvt.s32.f32 %v509
    %v702 = vcvt.s32.f32 %v510
    %v703 = vcvt.s32.f32 %v511
    %v704 = vcvt.s32.f32 %v512
    %v705 = vcvt.s32.f32 %v513
    %v706 = vcvt.s32.f32 %v514
    %v707 = vcvt.s32.f32 %v515
    %v708 = vcvt.s32.f32 %v516
    %v709 = vcvt.s32.f32 %v517
    %v710 = vcvt.s32.f32 %v518
    %v711 = vcvt.s32.f32 %v519
    %v712 = vcvt.s32.f32 %v520
    %v713 = vcvt.s32.f32 %v521
    %v714 = vcvt.s32.f32 %v522
    %v715 = vcvt.s32.f32 %v523
    %v716 = vcvt.s32.f32 %v524
    %v717 = vcvt.s32.f32 %v525
    %v718 = vcvt.s32.f32 %v526
    %v719 = vcvt.s32.f32 %v527
    %v720 = vcvt.s32.f32 %v528
    %v721 = vcvt.s32.f32 %v529
    %v722 = vcvt.s32.f32 %v530
    %v723 = vcvt.s32.f32 %v531
    %v724 = vcvt.s32.f32 %v532
    %v725 = vcvt.s32.f32 %v533
    %v726 = vcvt.s32.f32 %v534
    %v727 = vcvt.s32.f32 %v535
    %v728 = vcvt.s32.f32 %v536
    %v729 = vcvt.s32.f32 %v537
    %v730 = vcvt.s32.f32 %v538
    %v731 = vcvt.s32.f32 %v539
    %v732 = vcvt.s32.f32 %v540
    %v733 = vcvt.s32.f32 %v541
    %v734 = vcvt.s32.f32 %v542
    %v735 = vcvt.s32.f32 %v543
    %v736 = vcvt.s32.f32 %v544
    %v737 = vcvt.s32.f32 %v545
    %v738 = vcvt.s32.f32 %v546
    %v739 = vcvt.s32.f32 %v547
    %v740 = vcvt.s32.f32 %v548
    %v741 = vcvt.s32.f32 %v549
    %v742 = vcvt.s32.f32 %v550
    %v743 = vcvt.s32.f32 %v551
    %v744 = vcvt.s32.f32 %v552
    %v745 = vcvt.s32.f32 %v553
    %v746 = vcvt.s32.f32 %v554
    %v747 = vcvt.s32.f32 %v555
    %v748 = vcvt.s32.f32 %v556
    %v749 = vcvt.s32.f32 %v557
    %v750 = vcvt.s32.f32 %v558
    %v751 = vcvt.s32.f32 %v559
    %v752 = vcvt.s32.f32 %v560
    %v753 = vcvt.s32.f32 %v561
    %v754 = vcvt.s32.f32 %v562
    %v755 = vcvt.s32.f32 %v563
    %v756 = vcvt.s32.f32 %v564
    %v757 = vcvt.s32.f32 %v565
    %v758 = vcvt.s32.f32 %v566
    %v759 = vcvt.s32.f32 %v567
    %v760 = vcvt.s32.f32 %v568
    %v761 = vcvt.s32.f32 %v569
    %v762 = vcvt.s32.f32 %v570
    %v763 = vcvt.s32.f32 %v571
    %v764 = vcvt.s32.f32 %v572
    %v765 = vcvt.s32.f32 %v573
    %v766 = vcvt.s32.f32 %v574
    %v767 = vcvt.s32.f32 %v575
    %v768 = vcvt.s32.f32 %v576
    %v769 = vpack.c.bf16 %v579, %v577
    %v770 = vpack.c.bf16 %v580, %v578
    %v771 = vpack.c.bf16 %v583, %v581
    %v772 = vpack.c.bf16 %v584, %v582
    %v773 = vpack.c.bf16 %v587, %v585
    %v774 = vpack.c.bf16 %v588, %v586
    %v775 = vpack.c.bf16 %v591, %v589
    %v776 = vpack.c.bf16 %v592, %v590
    %v777 = vpack.c.bf16 %v595, %v593
    %v778 = vpack.c.bf16 %v596, %v594
    %v779 = vpack.c.bf16 %v599, %v597
    %v780 = vpack.c.bf16 %v600, %v598
    %v781 = vpack.c.bf16 %v603, %v601
    %v782 = vpack.c.bf16 %v604, %v602
    %v783 = vpack.c.bf16 %v607, %v605
    %v784 = vpack.c.bf16 %v608, %v606
    %v785 = vpack.c.bf16 %v611, %v609
    %v786 = vpack.c.bf16 %v612, %v610
    %v787 = vpack.c.bf16 %v615, %v613
    %v788 = vpack.c.bf16 %v616, %v614
    %v789 = vpack.c.bf16 %v619, %v617
    %v790 = vpack.c.bf16 %v620, %v618
    %v791 = vpack.c.bf16 %v623, %v621
    %v792 = vpack.c.bf16 %v624, %v622
    %v793 = vpack.c.bf16 %v627, %v625
    %v794 = vpack.c.bf16 %v628, %v626
    %v795 = vpack.c.bf16 %v631, %v629
    %v796 = vpack.c.bf16 %v632, %v630
    %v797 = vpack.c.bf16 %v635, %v633
    %v798 = vpack.c.bf16 %v636, %v634
    %v799 = vpack.c.bf16 %v639, %v637
    %v800 = vpack.c.bf16 %v640, %v638
    %v801 = vpack.c.bf16 %v643, %v641
    %v802 = vpack.c.bf16 %v644, %v642
    %v803 = vpack.c.bf16 %v647, %v645
    %v804 = vpack.c.bf16 %v648, %v646
    %v805 = vpack.c.bf16 %v651, %v649
    %v806 = vpack.c.bf16 %v652, %v650
    %v807 = vpack.c.bf16 %v655, %v653
    %v808 = vpack.c.bf16 %v656, %v654
    %v809 = vpack.c.bf16 %v659, %v657
    %v810 = vpack.c.bf16 %v660, %v658
    %v811 = vpack.c.bf16 %v663, %v661
    %v812 = vpack.c.bf16 %v664, %v662
    %v813 = vpack.c.bf16 %v667, %v665
    %v814 = vpack.c.bf16 %v668, %v666
    %v815 = vpack.c.bf16 %v671, %v669
    %v816 = vpack.c.bf16 %v672, %v670
    %v817 = vpack.c.bf16 %v675, %v673
    %v818 = vpack.c.bf16 %v676, %v674
    %v819 = vpack.c.bf16 %v679, %v677
    %v820 = vpack.c.bf16 %v680, %v678
    %v821 = vpack.c.bf16 %v683, %v681
    %v822 = vpack.c.bf16 %v684, %v682
    %v823 = vpack.c.bf16 %v687, %v685
    %v824 = vpack.c.bf16 %v688, %v686
    %v825 = vpack.c.bf16 %v691, %v689
    %v826 = vpack.c.bf16 %v692, %v690
    %v827 = vpack.c.bf16 %v695, %v693
    %v828 = vpack.c.bf16 %v696, %v694
    %v829 = vpack.c.bf16 %v699, %v697
    %v830 = vpack.c.bf16 %v700, %v698
    %v831 = vpack.c.bf16 %v703, %v701
    %v832 = vpack.c.bf16 %v704, %v702
    %v833 = vpack.c.bf16 %v707, %v705
    %v834 = vpack.c.bf16 %v708, %v706
    %v835 = vpack.c.bf16 %v711, %v709
    %v836 = vpack.c.bf16 %v712, %v710
    %v837 = vpack.c.bf16 %v715, %v713
    %v838 = vpack.c.bf16 %v716, %v714
    %v839 = vpack.c.bf16 %v719, %v717
    %v840 = vpack.c.bf16 %v720, %v718
    %v841 = vpack.c.bf16 %v723, %v721
    %v842 = vpack.c.bf16 %v724, %v722
    %v843 = vpack.c.bf16 %v727, %v725
    %v844 = vpack.c.bf16 %v728, %v726
    %v845 = vpack.c.bf16 %v731, %v729
    %v846 = vpack.c.bf16 %v732, %v730
    %v847 = vpack.c.bf16 %v735, %v733
    %v848 = vpack.c.bf16 %v736, %v734
    %v849 = vpack.c.bf16 %v739, %v737
    %v850 = vpack.c.bf16 %v740, %v738
    %v851 = vpack.c.bf16 %v743, %v741
    %v852 = vpack.c.bf16 %v744, %v742
    %v853 = vpack.c.bf16 %v747, %v745
    %v854 = vpack.c.bf16 %v748, %v746
    %v855 = vpack.c.bf16 %v751, %v749
    %v856 = vpack.c.bf16 %v752, %v750
    %v857 = vpack.c.bf16 %v755, %v753
    %v858 = vpack.c.bf16 %v756, %v754
    %v859 = vpack.c.bf16 %v759, %v757
    %v860 = vpack.c.bf16 %v760, %v758
    %v861 = vpack.c.bf16 %v763, %v761
    %v862 = vpack.c.bf16 %v764, %v762
    %v863 = vpack.c.bf16 %v767, %v765
    %v864 = vpack.c.bf16 %v768, %v766
    %v865 = vld [vmem:[#allocation5] sm:$0xff]
    %v866 = vld [vmem:[#allocation5 + $0x8] sm:$0xff]
    %v867 = vld [vmem:[#allocation5 + $0x10] sm:$0xff]
    %v868 = vld [vmem:[#allocation5 + $0x18] sm:$0xff]
    %v869 = vld [vmem:[#allocation5 + $0x20] sm:$0xff]
    %v870 = vld [vmem:[#allocation5 + $0x28] sm:$0xff]
    %v871 = vld [vmem:[#allocation5 + $0x30] sm:$0xff]
    %v872 = vld [vmem:[#allocation5 + $0x38] sm:$0xff]
    %v873 = vld [vmem:[#allocation5 + $0x40] sm:$0xff]
    %v874 = vld [vmem:[#allocation5 + $0x48] sm:$0xff]
    %v875 = vld [vmem:[#allocation5 + $0x50] sm:$0xff]
    %v876 = vld [vmem:[#allocation5 + $0x58] sm:$0xff]
    %v877 = vld [vmem:[#allocation5 + $0x60] sm:$0xff]
    %v878 = vld [vmem:[#allocation5 + $0x68] sm:$0xff]
    %v879 = vld [vmem:[#allocation5 + $0x70] sm:$0xff]
    %v880 = vld [vmem:[#allocation5 + $0x78] sm:$0xff]
    %v881 = vld [vmem:[#allocation5 + $0x80] sm:$0xff]
    %v882 = vld [vmem:[#allocation5 + $0x88] sm:$0xff]
    %v883 = vld [vmem:[#allocation5 + $0x90] sm:$0xff]
    %v884 = vld [vmem:[#allocation5 + $0x98] sm:$0xff]
    %v885 = vld [vmem:[#allocation5 + $0xa0] sm:$0xff]
    %v886 = vld [vmem:[#allocation5 + $0xa8] sm:$0xff]
    %v887 = vld [vmem:[#allocation5 + $0xb0] sm:$0xff]
    %v888 = vld [vmem:[#allocation5 + $0xb8] sm:$0xff]
    %v889 = vld [vmem:[#allocation5 + $0xc0] sm:$0xff]
    %v890 = vld [vmem:[#allocation5 + $0xc8] sm:$0xff]
    %v891 = vld [vmem:[#allocation5 + $0xd0] sm:$0xff]
    %v892 = vld [vmem:[#allocation5 + $0xd8] sm:$0xff]
    %v893 = vld [vmem:[#allocation5 + $0xe0] sm:$0xff]
    %v894 = vld [vmem:[#allocation5 + $0xe8] sm:$0xff]
    %v895 = vld [vmem:[#allocation5 + $0xf0] sm:$0xff]
    %v896 = vld [vmem:[#allocation5 + $0xf8] sm:$0xff]
    %v897 = vld [vmem:[#allocation5 + $0x100] sm:$0xff]
    %v898 = vld [vmem:[#allocation5 + $0x108] sm:$0xff]
    %v899 = vld [vmem:[#allocation5 + $0x110] sm:$0xff]
    %v900 = vld [vmem:[#allocation5 + $0x118] sm:$0xff]
    %v901 = vld [vmem:[#allocation5 + $0x120] sm:$0xff]
    %v902 = vld [vmem:[#allocation5 + $0x128] sm:$0xff]
    %v903 = vld [vmem:[#allocation5 + $0x130] sm:$0xff]
    %v904 = vld [vmem:[#allocation5 + $0x138] sm:$0xff]
    %v905 = vld [vmem:[#allocation5 + $0x140] sm:$0xff]
    %v906 = vld [vmem:[#allocation5 + $0x148] sm:$0xff]
    %v907 = vld [vmem:[#allocation5 + $0x150] sm:$0xff]
    %v908 = vld [vmem:[#allocation5 + $0x158] sm:$0xff]
    %v909 = vld [vmem:[#allocation5 + $0x160] sm:$0xff]
    %v910 = vld [vmem:[#allocation5 + $0x168] sm:$0xff]
    %v911 = vld [vmem:[#allocation5 + $0x170] sm:$0xff]
    %v912 = vld [vmem:[#allocation5 + $0x178] sm:$0xff]
    %v961 = vunpack.c.l.b16 %v865
    %v962 = vunpack.c.h.b16 %v865
    %v963 = vunpack.c.l.b16 %v866
    %v964 = vunpack.c.h.b16 %v866
    %v965 = vunpack.c.l.b16 %v867
    %v966 = vunpack.c.h.b16 %v867
    %v967 = vunpack.c.l.b16 %v868
    %v968 = vunpack.c.h.b16 %v868
    %v969 = vunpack.c.l.b16 %v869
    %v970 = vunpack.c.h.b16 %v869
    %v971 = vunpack.c.l.b16 %v870
    %v972 = vunpack.c.h.b16 %v870
    %v973 = vunpack.c.l.b16 %v871
    %v974 = vunpack.c.h.b16 %v871
    %v975 = vunpack.c.l.b16 %v872
    %v976 = vunpack.c.h.b16 %v872
    %v977 = vunpack.c.l.b16 %v873
    %v978 = vunpack.c.h.b16 %v873
    %v979 = vunpack.c.l.b16 %v874
    %v980 = vunpack.c.h.b16 %v874
    %v981 = vunpack.c.l.b16 %v875
    %v982 = vunpack.c.h.b16 %v875
    %v983 = vunpack.c.l.b16 %v876
    %v984 = vunpack.c.h.b16 %v876
    %v985 = vunpack.c.l.b16 %v877
    %v986 = vunpack.c.h.b16 %v877
    %v987 = vunpack.c.l.b16 %v878
    %v988 = vunpack.c.h.b16 %v878
    %v989 = vunpack.c.l.b16 %v879
    %v990 = vunpack.c.h.b16 %v879
    %v991 = vunpack.c.l.b16 %v880
    %v992 = vunpack.c.h.b16 %v880
    %v993 = vunpack.c.l.b16 %v881
    %v994 = vunpack.c.h.b16 %v881
    %v995 = vunpack.c.l.b16 %v882
    %v996 = vunpack.c.h.b16 %v882
    %v997 = vunpack.c.l.b16 %v883
    %v998 = vunpack.c.h.b16 %v883
    %v999 = vunpack.c.l.b16 %v884
    %v1000 = vunpack.c.h.b16 %v884
    %v1001 = vunpack.c.l.b16 %v885
    %v1002 = vunpack.c.h.b16 %v885
    %v1003 = vunpack.c.l.b16 %v886
    %v1004 = vunpack.c.h.b16 %v886
    %v1005 = vunpack.c.l.b16 %v887
    %v1006 = vunpack.c.h.b16 %v887
    %v1007 = vunpack.c.l.b16 %v888
    %v1008 = vunpack.c.h.b16 %v888
    %v1009 = vunpack.c.l.b16 %v889
    %v1010 = vunpack.c.h.b16 %v889
    %v1011 = vunpack.c.l.b16 %v890
    %v1012 = vunpack.c.h.b16 %v890
    %v1013 = vunpack.c.l.b16 %v891
    %v1014 = vunpack.c.h.b16 %v891
    %v1015 = vunpack.c.l.b16 %v892
    %v1016 = vunpack.c.h.b16 %v892
    %v1017 = vunpack.c.l.b16 %v893
    %v1018 = vunpack.c.h.b16 %v893
    %v1019 = vunpack.c.l.b16 %v894
    %v1020 = vunpack.c.h.b16 %v894
    %v1021 = vunpack.c.l.b16 %v895
    %v1022 = vunpack.c.h.b16 %v895
    %v1023 = vunpack.c.l.b16 %v896
    %v1024 = vunpack.c.h.b16 %v896
    %v1025 = vunpack.c.l.b16 %v897
    %v1026 = vunpack.c.h.b16 %v897
    %v1027 = vunpack.c.l.b16 %v898
    %v1028 = vunpack.c.h.b16 %v898
    %v1029 = vunpack.c.l.b16 %v899
    %v1030 = vunpack.c.h.b16 %v899
    %v1031 = vunpack.c.l.b16 %v900
    %v1032 = vunpack.c.h.b16 %v900
    %v1033 = vunpack.c.l.b16 %v901
    %v1034 = vunpack.c.h.b16 %v901
    %v1035 = vunpack.c.l.b16 %v902
    %v1036 = vunpack.c.h.b16 %v902
    %v1037 = vunpack.c.l.b16 %v903
    %v1038 = vunpack.c.h.b16 %v903
    %v1039 = vunpack.c.l.b16 %v904
    %v1040 = vunpack.c.h.b16 %v904
    %v1041 = vunpack.c.l.b16 %v905
    %v1042 = vunpack.c.h.b16 %v905
    %v1043 = vunpack.c.l.b16 %v906
    %v1044 = vunpack.c.h.b16 %v906
    %v1045 = vunpack.c.l.b16 %v907
    %v1046 = vunpack.c.h.b16 %v907
    %v1047 = vunpack.c.l.b16 %v908
    %v1048 = vunpack.c.h.b16 %v908
    %v1049 = vunpack.c.l.b16 %v909
    %v1050 = vunpack.c.h.b16 %v909
    %v1051 = vunpack.c.l.b16 %v910
    %v1052 = vunpack.c.h.b16 %v910
    %v1053 = vunpack.c.l.b16 %v911
    %v1054 = vunpack.c.h.b16 %v911
    %v1055 = vunpack.c.l.b16 %v912
    %v1056 = vunpack.c.h.b16 %v912
    %v1057 = vpack.c.b16 %v967, %v961
    %v1058 = vpack.c.b16 %v968, %v962
    %v1059 = vpack.c.b16 %v969, %v963
    %v1060 = vpack.c.b16 %v970, %v964
    %v1061 = vpack.c.b16 %v971, %v965
    %v1062 = vpack.c.b16 %v972, %v966
    %v1063 = vpack.c.b16 %v979, %v973
    %v1064 = vpack.c.b16 %v980, %v974
    %v1065 = vpack.c.b16 %v981, %v975
    %v1066 = vpack.c.b16 %v982, %v976
    %v1067 = vpack.c.b16 %v983, %v977
    %v1068 = vpack.c.b16 %v984, %v978
    %v1069 = vpack.c.b16 %v991, %v985
    %v1070 = vpack.c.b16 %v992, %v986
    %v1071 = vpack.c.b16 %v993, %v987
    %v1072 = vpack.c.b16 %v994, %v988
    %v1073 = vpack.c.b16 %v995, %v989
    %v1074 = vpack.c.b16 %v996, %v990
    %v1075 = vpack.c.b16 %v1003, %v997
    %v1076 = vpack.c.b16 %v1004, %v998
    %v1077 = vpack.c.b16 %v1005, %v999
    %v1078 = vpack.c.b16 %v1006, %v1000
    %v1079 = vpack.c.b16 %v1007, %v1001
    %v1080 = vpack.c.b16 %v1008, %v1002
    %v1081 = vpack.c.b16 %v1015, %v1009
    %v1082 = vpack.c.b16 %v1016, %v1010
    %v1083 = vpack.c.b16 %v1017, %v1011
    %v1084 = vpack.c.b16 %v1018, %v1012
    %v1085 = vpack.c.b16 %v1019, %v1013
    %v1086 = vpack.c.b16 %v1020, %v1014
    %v1087 = vpack.c.b16 %v1027, %v1021
    %v1088 = vpack.c.b16 %v1028, %v1022
    %v1089 = vpack.c.b16 %v1029, %v1023
    %v1090 = vpack.c.b16 %v1030, %v1024
    %v1091 = vpack.c.b16 %v1031, %v1025
    %v1092 = vpack.c.b16 %v1032, %v1026
    %v1093 = vpack.c.b16 %v1039, %v1033
    %v1094 = vpack.c.b16 %v1040, %v1034
    %v1095 = vpack.c.b16 %v1041, %v1035
    %v1096 = vpack.c.b16 %v1042, %v1036
    %v1097 = vpack.c.b16 %v1043, %v1037
    %v1098 = vpack.c.b16 %v1044, %v1038
    %v1099 = vpack.c.b16 %v1051, %v1045
    %v1100 = vpack.c.b16 %v1052, %v1046
    %v1101 = vpack.c.b16 %v1053, %v1047
    %v1102 = vpack.c.b16 %v1054, %v1048
    %v1103 = vpack.c.b16 %v1055, %v1049
    %v1104 = vpack.c.b16 %v1056, %v1050
    %1153 = vmatprep.subr.bf16.mxu0 %v770
    %1154 = vmatpush1.bf16.msra.mxu0 %v769
    %1155 = vmatprep.subr.bf16.mxu0 %v772
    %1156 = vmatpush1.bf16.msra.mxu0 %v771
    %1157 = vmatprep.subr.bf16.mxu0 %v774
    %1158 = vmatpush1.bf16.msra.mxu0 %v773
    %1159 = vmatprep.subr.bf16.mxu0 %v776
    %1160 = vmatpush1.bf16.msra.mxu0 %v775
    %1161 = vmatprep.subr.bf16.mxu0 %v778
    %1162 = vmatpush1.bf16.msra.mxu0 %v777
    %1163 = vmatprep.subr.bf16.mxu0 %v780
    %1164 = vmatpush1.bf16.msra.mxu0 %v779
    %1165 = vmatprep.subr.bf16.mxu0 %v782
    %1166 = vmatpush1.bf16.msra.mxu0 %v781
    %1167 = vmatprep.subr.bf16.mxu0 %v784
    %1168 = vmatpush1.bf16.msra.mxu0 %v783
    %1169 = vmatprep.subr.bf16.mxu0 %v786
    %1170 = vmatpush1.bf16.msra.mxu0 %v785
    %1171 = vmatprep.subr.bf16.mxu0 %v788
    %1172 = vmatpush1.bf16.msra.mxu0 %v787
    %1173 = vmatprep.subr.bf16.mxu0 %v790
    %1174 = vmatpush1.bf16.msra.mxu0 %v789
    %1175 = vmatprep.subr.bf16.mxu0 %v792
    %1176 = vmatpush1.bf16.msra.mxu0 %v791
    %1177 = vmatprep.subr.bf16.mxu0 %v794
    %1178 = vmatpush1.bf16.msra.mxu0 %v793
    %1179 = vmatprep.subr.bf16.mxu0 %v796
    %1180 = vmatpush1.bf16.msra.mxu0 %v795
    %1181 = vmatprep.subr.bf16.mxu0 %v798
    %1182 = vmatpush1.bf16.msra.mxu0 %v797
    %1183 = vmatprep.subr.bf16.mxu0 %v800
    %1184 = vmatpush1.bf16.msra.mxu0 %v799
    %1185 = vmatprep.mubr.bf16.mxu0 %v1058
    %1186 = vmatmul.mubr.bf16.gmra.mrb[0].mxu0 %v1057
    %v1187 = vpop.f32.mrb[0].mxu0
    %v1188 = vadd.f32 0.0, %v1187
    %v1189 = vpop.f32.mrb[0].mxu0
    %v1190 = vadd.f32 0.0, %v1189
    %v1191 = vpop.f32.mrb[0].mxu0
    %v1192 = vadd.f32 0.0, %v1191
    %v1193 = vpop.f32.mrb[0].mxu0
    %v1194 = vadd.f32 0.0, %v1193
    %1195 = vmatprep.mubr.bf16.mxu0 %v1064
    %1196 = vmatmul.mubr.bf16.gmra.mrb[0].mxu0 %v1063
    %v1197 = vpop.f32.mrb[0].mxu0
    %v1198 = vadd.f32 0.0, %v1197
    %v1199 = vpop.f32.mrb[0].mxu0
    %v1200 = vadd.f32 0.0, %v1199
    %v1201 = vpop.f32.mrb[0].mxu0
    %v1202 = vadd.f32 0.0, %v1201
    %v1203 = vpop.f32.mrb[0].mxu0
    %v1204 = vadd.f32 0.0, %v1203
    %1205 = vmatprep.mubr.bf16.mxu0 %v1070
    %1206 = vmatmul.mubr.bf16.gmra.mrb[0].mxu0 %v1069
    %v1207 = vpop.f32.mrb[0].mxu0
    %v1208 = vadd.f32 0.0, %v1207
    %v1209 = vpop.f32.mrb[0].mxu0
    %v1210 = vadd.f32 0.0, %v1209
    %v1211 = vpop.f32.mrb[0].mxu0
    %v1212 = vadd.f32 0.0, %v1211
    %v1213 = vpop.f32.mrb[0].mxu0
    %v1214 = vadd.f32 0.0, %v1213
    %1215 = vmatprep.mubr.bf16.mxu0 %v1076
    %1216 = vmatmul.mubr.bf16.gmra.mrb[0].mxu0 %v1075
    %v1217 = vpop.f32.mrb[0].mxu0
    %v1218 = vadd.f32 0.0, %v1217
    %v1219 = vpop.f32.mrb[0].mxu0
    %v1220 = vadd.f32 0.0, %v1219
    %v1221 = vpop.f32.mrb[0].mxu0
    %v1222 = vadd.f32 0.0, %v1221
    %v1223 = vpop.f32.mrb[0].mxu0
    %v1224 = vadd.f32 0.0, %v1223
    %1225 = vmatprep.mubr.bf16.mxu0 %v1082
    %1226 = vmatmul.mubr.bf16.gmra.mrb[0].mxu0 %v1081
    %v1227 = vpop.f32.mrb[0].mxu0
    %v1228 = vadd.f32 0.0, %v1227
    %v1229 = vpop.f32.mrb[0].mxu0
    %v1230 = vadd.f32 0.0, %v1229
    %v1231 = vpop.f32.mrb[0].mxu0
    %v1232 = vadd.f32 0.0, %v1231
    %v1233 = vpop.f32.mrb[0].mxu0
    %v1234 = vadd.f32 0.0, %v1233
    %1235 = vmatprep.mubr.bf16.mxu0 %v1088
    %1236 = vmatmul.mubr.bf16.gmra.mrb[0].mxu0 %v1087
    %v1237 = vpop.f32.mrb[0].mxu0
    %v1238 = vadd.f32 0.0, %v1237
    %v1239 = vpop.f32.mrb[0].mxu0
    %v1240 = vadd.f32 0.0, %v1239
    %v1241 = vpop.f32.mrb[0].mxu0
    %v1242 = vadd.f32 0.0, %v1241
    %v1243 = vpop.f32.mrb[0].mxu0
    %v1244 = vadd.f32 0.0, %v1243
    %1245 = vmatprep.mubr.bf16.mxu0 %v1094
    %1246 = vmatmul.mubr.bf16.gmra.mrb[0].mxu0 %v1093
    %v1247 = vpop.f32.mrb[0].mxu0
    %v1248 = vadd.f32 0.0, %v1247
    %v1249 = vpop.f32.mrb[0].mxu0
    %v1250 = vadd.f32 0.0, %v1249
    %v1251 = vpop.f32.mrb[0].mxu0
    %v1252 = vadd.f32 0.0, %v1251
    %v1253 = vpop.f32.mrb[0].mxu0
    %v1254 = vadd.f32 0.0, %v1253
    %1255 = vmatprep.mubr.bf16.mxu0 %v1100
    %1256 = vmatmul.mubr.bf16.gmra.mrb[0].mxu0 %v1099
    %v1257 = vpop.f32.mrb[0].mxu0
    %v1258 = vadd.f32 0.0, %v1257
    %v1259 = vpop.f32.mrb[0].mxu0
    %v1260 = vadd.f32 0.0, %v1259
    %v1261 = vpop.f32.mrb[0].mxu0
    %v1262 = vadd.f32 0.0, %v1261
    %v1263 = vpop.f32.mrb[0].mxu0
    %v1264 = vadd.f32 0.0, %v1263
    %1265 = vdwg.mxu0
    %1266 = vmatprep.subr.bf16.mxu0 %v802
    %1267 = vmatpush1.bf16.msra.mxu0 %v801
    %1268 = vmatprep.subr.bf16.mxu0 %v804
    %1269 = vmatpush1.bf16.msra.mxu0 %v803
    %1270 = vmatprep.subr.bf16.mxu0 %v806
    %1271 = vmatpush1.bf16.msra.mxu0 %v805
    %1272 = vmatprep.subr.bf16.mxu0 %v808
    %1273 = vmatpush1.bf16.msra.mxu0 %v807
    %1274 = vmatprep.subr.bf16.mxu0 %v810
    %1275 = vmatpush1.bf16.msra.mxu0 %v809
    %1276 = vmatprep.subr.bf16.mxu0 %v812
    %1277 = vmatpush1.bf16.msra.mxu0 %v811
    %1278 = vmatprep.subr.bf16.mxu0 %v814
    %1279 = vmatpush1.bf16.msra.mxu0 %v813
    %1280 = vmatprep.subr.bf16.mxu0 %v816
    %1281 = vmatpush1.bf16.msra.mxu0 %v815
    %1282 = vmatprep.subr.bf16.mxu0 %v818
    %1283 = vmatpush1.bf16.msra.mxu0 %v817
    %1284 = vmatprep.subr.bf16.mxu0 %v820
    %1285 = vmatpush1.bf16.msra.mxu0 %v819
    %1286 = vmatprep.subr.bf16.mxu0 %v822
    %1287 = vmatpush1.bf16.msra.mxu0 %v821
    %1288 = vmatprep.subr.bf16.mxu0 %v824
    %1289 = vmatpush1.bf16.msra.mxu0 %v823
    %1290 = vmatprep.subr.bf16.mxu0 %v826
    %1291 = vmatpush1.bf16.msra.mxu0 %v825
    %1292 = vmatprep.subr.bf16.mxu0 %v828
    %1293 = vmatpush1.bf16.msra.mxu0 %v827
    %1294 = vmatprep.subr.bf16.mxu0 %v830
    %1295 = vmatpush1.bf16.msra.mxu0 %v829
    %1296 = vmatprep.subr.bf16.mxu0 %v832
    %1297 = vmatpush1.bf16.msra.mxu0 %v831
    %1298 = vmatprep.mubr.bf16.mxu0 %v1060
    %1299 = vmatmul.mubr.bf16.gmra.mrb[0].mxu0 %v1059
    %v1300 = vpop.f32.mrb[0].mxu0
    %v1301 = vadd.f32 %v1188, %v1300
    %v1302 = vpop.f32.mrb[0].mxu0
    %v1303 = vadd.f32 %v1190, %v1302
    %v1304 = vpop.f32.mrb[0].mxu0
    %v1305 = vadd.f32 %v1192, %v1304
    %v1306 = vpop.f32.mrb[0].mxu0
    %v1307 = vadd.f32 %v1194, %v1306
    %1308 = vmatprep.mubr.bf16.mxu0 %v1066
    %1309 = vmatmul.mubr.bf16.gmra.mrb[0].mxu0 %v1065
    %v1310 = vpop.f32.mrb[0].mxu0
    %v1311 = vadd.f32 %v1198, %v1310
    %v1312 = vpop.f32.mrb[0].mxu0
    %v1313 = vadd.f32 %v1200, %v1312
    %v1314 = vpop.f32.mrb[0].mxu0
    %v1315 = vadd.f32 %v1202, %v1314
    %v1316 = vpop.f32.mrb[0].mxu0
    %v1317 = vadd.f32 %v1204, %v1316
    %1318 = vmatprep.mubr.bf16.mxu0 %v1072
    %1319 = vmatmul.mubr.bf16.gmra.mrb[0].mxu0 %v1071
    %v1320 = vpop.f32.mrb[0].mxu0
    %v1321 = vadd.f32 %v1208, %v1320
    %v1322 = vpop.f32.mrb[0].mxu0
    %v1323 = vadd.f32 %v1210, %v1322
    %v1324 = vpop.f32.mrb[0].mxu0
    %v1325 = vadd.f32 %v1212, %v1324
    %v1326 = vpop.f32.mrb[0].mxu0
    %v1327 = vadd.f32 %v1214, %v1326
    %1328 = vmatprep.mubr.bf16.mxu0 %v1078
    %1329 = vmatmul.mubr.bf16.gmra.mrb[0].mxu0 %v1077
    %v1330 = vpop.f32.mrb[0].mxu0
    %v1331 = vadd.f32 %v1218, %v1330
    %v1332 = vpop.f32.mrb[0].mxu0
    %v1333 = vadd.f32 %v1220, %v1332
    %v1334 = vpop.f32.mrb[0].mxu0
    %v1335 = vadd.f32 %v1222, %v1334
    %v1336 = vpop.f32.mrb[0].mxu0
    %v1337 = vadd.f32 %v1224, %v1336
    %1338 = vmatprep.mubr.bf16.mxu0 %v1084
    %1339 = vmatmul.mubr.bf16.gmra.mrb[0].mxu0 %v1083
    %v1340 = vpop.f32.mrb[0].mxu0
    %v1341 = vadd.f32 %v1228, %v1340
    %v1342 = vpop.f32.mrb[0].mxu0
    %v1343 = vadd.f32 %v1230, %v1342
    %v1344 = vpop.f32.mrb[0].mxu0
    %v1345 = vadd.f32 %v1232, %v1344
    %v1346 = vpop.f32.mrb[0].mxu0
    %v1347 = vadd.f32 %v1234, %v1346
    %1348 = vmatprep.mubr.bf16.mxu0 %v1090
    %1349 = vmatmul.mubr.bf16.gmra.mrb[0].mxu0 %v1089
    %v1350 = vpop.f32.mrb[0].mxu0
    %v1351 = vadd.f32 %v1238, %v1350
    %v1352 = vpop.f32.mrb[0].mxu0
    %v1353 = vadd.f32 %v1240, %v1352
    %v1354 = vpop.f32.mrb[0].mxu0
    %v1355 = vadd.f32 %v1242, %v1354
    %v1356 = vpop.f32.mrb[0].mxu0
    %v1357 = vadd.f32 %v1244, %v1356
    %1358 = vmatprep.mubr.bf16.mxu0 %v1096
    %1359 = vmatmul.mubr.bf16.gmra.mrb[0].mxu0 %v1095
    %v1360 = vpop.f32.mrb[0].mxu0
    %v1361 = vadd.f32 %v1248, %v1360
    %v1362 = vpop.f32.mrb[0].mxu0
    %v1363 = vadd.f32 %v1250, %v1362
    %v1364 = vpop.f32.mrb[0].mxu0
    %v1365 = vadd.f32 %v1252, %v1364
    %v1366 = vpop.f32.mrb[0].mxu0
    %v1367 = vadd.f32 %v1254, %v1366
    %1368 = vmatprep.mubr.bf16.mxu0 %v1102
    %1369 = vmatmul.mubr.bf16.gmra.mrb[0].mxu0 %v1101
    %v1370 = vpop.f32.mrb[0].mxu0
    %v1371 = vadd.f32 %v1258, %v1370
    %v1372 = vpop.f32.mrb[0].mxu0
    %v1373 = vadd.f32 %v1260, %v1372
    %v1374 = vpop.f32.mrb[0].mxu0
    %v1375 = vadd.f32 %v1262, %v1374
    %v1376 = vpop.f32.mrb[0].mxu0
    %v1377 = vadd.f32 %v1264, %v1376
    %1378 = vdwg.mxu0
    %1379 = vmatprep.subr.bf16.mxu0 %v834
    %1380 = vmatpush1.bf16.msra.mxu0 %v833
    %1381 = vmatprep.subr.bf16.mxu0 %v836
    %1382 = vmatpush1.bf16.msra.mxu0 %v835
    %1383 = vmatprep.subr.bf16.mxu0 %v838
    %1384 = vmatpush1.bf16.msra.mxu0 %v837
    %1385 = vmatprep.subr.bf16.mxu0 %v840
    %1386 = vmatpush1.bf16.msra.mxu0 %v839
    %1387 = vmatprep.subr.bf16.mxu0 %v842
    %1388 = vmatpush1.bf16.msra.mxu0 %v841
    %1389 = vmatprep.subr.bf16.mxu0 %v844
    %1390 = vmatpush1.bf16.msra.mxu0 %v843
    %1391 = vmatprep.subr.bf16.mxu0 %v846
    %1392 = vmatpush1.bf16.msra.mxu0 %v845
    %1393 = vmatprep.subr.bf16.mxu0 %v848
    %1394 = vmatpush1.bf16.msra.mxu0 %v847
    %1395 = vmatprep.subr.bf16.mxu0 %v850
    %1396 = vmatpush1.bf16.msra.mxu0 %v849
    %1397 = vmatprep.subr.bf16.mxu0 %v852
    %1398 = vmatpush1.bf16.msra.mxu0 %v851
    %1399 = vmatprep.subr.bf16.mxu0 %v854
    %1400 = vmatpush1.bf16.msra.mxu0 %v853
    %1401 = vmatprep.subr.bf16.mxu0 %v856
    %1402 = vmatpush1.bf16.msra.mxu0 %v855
    %1403 = vmatprep.subr.bf16.mxu0 %v858
    %1404 = vmatpush1.bf16.msra.mxu0 %v857
    %1405 = vmatprep.subr.bf16.mxu0 %v860
    %1406 = vmatpush1.bf16.msra.mxu0 %v859
    %1407 = vmatprep.subr.bf16.mxu0 %v862
    %1408 = vmatpush1.bf16.msra.mxu0 %v861
    %1409 = vmatprep.subr.bf16.mxu0 %v864
    %1410 = vmatpush1.bf16.msra.mxu0 %v863
    %1411 = vmatprep.mubr.bf16.mxu0 %v1062
    %1412 = vmatmul.mubr.bf16.gmra.mrb[0].mxu0 %v1061
    %v1413 = vpop.f32.mrb[0].mxu0
    %v1414 = vadd.f32 %v1301, %v1413
    %v1415 = vpop.f32.mrb[0].mxu0
    %v1416 = vadd.f32 %v1303, %v1415
    %v1417 = vpop.f32.mrb[0].mxu0
    %v1418 = vadd.f32 %v1305, %v1417
    %v1419 = vpop.f32.mrb[0].mxu0
    %v1420 = vadd.f32 %v1307, %v1419
    %1421 = vmatprep.mubr.bf16.mxu0 %v1068
    %1422 = vmatmul.mubr.bf16.gmra.mrb[0].mxu0 %v1067
    %v1423 = vpop.f32.mrb[0].mxu0
    %v1424 = vadd.f32 %v1311, %v1423
    %v1425 = vpop.f32.mrb[0].mxu0
    %v1426 = vadd.f32 %v1313, %v1425
    %v1427 = vpop.f32.mrb[0].mxu0
    %v1428 = vadd.f32 %v1315, %v1427
    %v1429 = vpop.f32.mrb[0].mxu0
    %v1430 = vadd.f32 %v1317, %v1429
    %1431 = vmatprep.mubr.bf16.mxu0 %v1074
    %1432 = vmatmul.mubr.bf16.gmra.mrb[0].mxu0 %v1073
    %v1433 = vpop.f32.mrb[0].mxu0
    %v1434 = vadd.f32 %v1321, %v1433
    %v1435 = vpop.f32.mrb[0].mxu0
    %v1436 = vadd.f32 %v1323, %v1435
    %v1437 = vpop.f32.mrb[0].mxu0
    %v1438 = vadd.f32 %v1325, %v1437
    %v1439 = vpop.f32.mrb[0].mxu0
    %v1440 = vadd.f32 %v1327, %v1439
    %1441 = vmatprep.mubr.bf16.mxu0 %v1080
    %1442 = vmatmul.mubr.bf16.gmra.mrb[0].mxu0 %v1079
    %v1443 = vpop.f32.mrb[0].mxu0
    %v1444 = vadd.f32 %v1331, %v1443
    %v1445 = vpop.f32.mrb[0].mxu0
    %v1446 = vadd.f32 %v1333, %v1445
    %v1447 = vpop.f32.mrb[0].mxu0
    %v1448 = vadd.f32 %v1335, %v1447
    %v1449 = vpop.f32.mrb[0].mxu0
    %v1450 = vadd.f32 %v1337, %v1449
    %1451 = vmatprep.mubr.bf16.mxu0 %v1086
    %1452 = vmatmul.mubr.bf16.gmra.mrb[0].mxu0 %v1085
    %v1453 = vpop.f32.mrb[0].mxu0
    %v1454 = vadd.f32 %v1341, %v1453
    %v1455 = vpop.f32.mrb[0].mxu0
    %v1456 = vadd.f32 %v1343, %v1455
    %v1457 = vpop.f32.mrb[0].mxu0
    %v1458 = vadd.f32 %v1345, %v1457
    %v1459 = vpop.f32.mrb[0].mxu0
    %v1460 = vadd.f32 %v1347, %v1459
    %1461 = vmatprep.mubr.bf16.mxu0 %v1092
    %1462 = vmatmul.mubr.bf16.gmra.mrb[0].mxu0 %v1091
    %v1463 = vpop.f32.mrb[0].mxu0
    %v1464 = vadd.f32 %v1351, %v1463
    %v1465 = vpop.f32.mrb[0].mxu0
    %v1466 = vadd.f32 %v1353, %v1465
    %v1467 = vpop.f32.mrb[0].mxu0
    %v1468 = vadd.f32 %v1355, %v1467
    %v1469 = vpop.f32.mrb[0].mxu0
    %v1470 = vadd.f32 %v1357, %v1469
    %1471 = vmatprep.mubr.bf16.mxu0 %v1098
    %1472 = vmatmul.mubr.bf16.gmra.mrb[0].mxu0 %v1097
    %v1473 = vpop.f32.mrb[0].mxu0
    %v1474 = vadd.f32 %v1361, %v1473
    %v1475 = vpop.f32.mrb[0].mxu0
    %v1476 = vadd.f32 %v1363, %v1475
    %v1477 = vpop.f32.mrb[0].mxu0
    %v1478 = vadd.f32 %v1365, %v1477
    %v1479 = vpop.f32.mrb[0].mxu0
    %v1480 = vadd.f32 %v1367, %v1479
    %1481 = vmatprep.mubr.bf16.mxu0 %v1104
    %1482 = vmatmul.mubr.bf16.gmra.mrb[0].mxu0 %v1103
    %v1483 = vpop.f32.mrb[0].mxu0
    %v1484 = vadd.f32 %v1371, %v1483
    %v1485 = vpop.f32.mrb[0].mxu0
    %v1486 = vadd.f32 %v1373, %v1485
    %v1487 = vpop.f32.mrb[0].mxu0
    %v1488 = vadd.f32 %v1375, %v1487
    %v1489 = vpop.f32.mrb[0].mxu0
    %v1490 = vadd.f32 %v1377, %v1489
    %1491 = vdwg.mxu0
    %v1492 = vadd.f32 %v1414, %v1454
    %v1493 = vadd.f32 %v1416, %v1456
    %v1494 = vadd.f32 %v1418, %v1458
    %v1495 = vadd.f32 %v1420, %v1460
    %v1496 = vadd.f32 %v1424, %v1464
    %v1497 = vadd.f32 %v1426, %v1466
    %v1498 = vadd.f32 %v1428, %v1468
    %v1499 = vadd.f32 %v1430, %v1470
    %v1500 = vadd.f32 %v1434, %v1474
    %v1501 = vadd.f32 %v1436, %v1476
    %v1502 = vadd.f32 %v1438, %v1478
    %v1503 = vadd.f32 %v1440, %v1480
    %v1504 = vadd.f32 %v1444, %v1484
    %v1505 = vadd.f32 %v1446, %v1486
    %v1506 = vadd.f32 %v1448, %v1488
    %v1507 = vadd.f32 %v1450, %v1490
    %v1508 = vsub.f32 1.0, %v58
    %v1509 = vsub.f32 1.0, %v59
    %v1512 = vrot.slane %v1508, 1
    %v1513 = vrot.slane %v1509, 1
    %v1516 = vmul.f32 %v1508, %v1512
    %v1517 = vmul.f32 %v1509, %v1513
    %v1520 = vrot.slane %v58, 1
    %v1521 = vrot.slane %v59, 1
    %v1524 = vmul.f32 %v1508, %v1520
    %v1525 = vmul.f32 %v1509, %v1521
    %v1526 = vmul.f32 %v58, %v1512
    %v1527 = vmul.f32 %v59, %v1513
    %v1528 = vmul.f32 %v58, %v1520
    %v1529 = vmul.f32 %v59, %v1521
    %v1532 = vrot.slane %v74, 6
    %v1533 = vrot.slane %v75, 6
    %v1536 = vmul.f32 %v1508, %v1532
    %v1537 = vmul.f32 %v1509, %v1533
    %v1538 = vmul.f32 %v58, %v1532
    %v1539 = vmul.f32 %v59, %v1533
    %v1542 = vrot.slane %v1536, 2
    %v1543 = vrot.slane %v1537, 2
    %v1546 = vmul.f32 %v1516, %v1542
    %v1547 = vmul.f32 %v1517, %v1543
    %v1548 = vlaneseq
    %v1549 = vshrl.u32 %v1548, 7
    %v1550 = vsub.s32 0, %v1549
    %v1551 = vrot.slane %v1546, %v1550
    %v1552 = vlaneseq
    %v1553 = vshrl.u32 %v1552, 7
    %v1554 = vsub.s32 0, %v1553
    %v1555 = vrot.slane %v1547, %v1554
    %v1556 = vmul.f32 %v1551, %v1492
    %v1557 = vmul.f32 %v1555, %v1493
    %v1560 = vrot.slane %v1538, 2
    %v1561 = vrot.slane %v1539, 2
    %v1564 = vmul.f32 %v1516, %v1560
    %v1565 = vmul.f32 %v1517, %v1561
    %v1566 = vlaneseq
    %v1567 = vshrl.u32 %v1566, 7
    %v1568 = vsub.s32 0, %v1567
    %v1569 = vrot.slane %v1564, %v1568
    %v1570 = vlaneseq
    %v1571 = vshrl.u32 %v1570, 7
    %v1572 = vsub.s32 0, %v1571
    %v1573 = vrot.slane %v1565, %v1572
    %v1574 = vmul.f32 %v1569, %v1494
    %v1575 = vmul.f32 %v1573, %v1495
    %v1576 = vadd.f32 %v1556, %v1574
    %v1577 = vadd.f32 %v1557, %v1575
    %v1578 = vmul.f32 %v1524, %v1542
    %v1579 = vmul.f32 %v1525, %v1543
    %v1580 = vlaneseq
    %v1581 = vshrl.u32 %v1580, 7
    %v1582 = vsub.s32 0, %v1581
    %v1583 = vrot.slane %v1578, %v1582
    %v1584 = vlaneseq
    %v1585 = vshrl.u32 %v1584, 7
    %v1586 = vsub.s32 0, %v1585
    %v1587 = vrot.slane %v1579, %v1586
    %v1588 = vmul.f32 %v1583, %v1496
    %v1589 = vmul.f32 %v1587, %v1497
    %v1590 = vadd.f32 %v1576, %v1588
    %v1591 = vadd.f32 %v1577, %v1589
    %v1592 = vmul.f32 %v1524, %v1560
    %v1593 = vmul.f32 %v1525, %v1561
    %v1594 = vlaneseq
    %v1595 = vshrl.u32 %v1594, 7
    %v1596 = vsub.s32 0, %v1595
    %v1597 = vrot.slane %v1592, %v1596
    %v1598 = vlaneseq
    %v1599 = vshrl.u32 %v1598, 7
    %v1600 = vsub.s32 0, %v1599
    %v1601 = vrot.slane %v1593, %v1600
    %v1602 = vmul.f32 %v1597, %v1498
    %v1603 = vmul.f32 %v1601, %v1499
    %v1604 = vadd.f32 %v1590, %v1602
    %v1605 = vadd.f32 %v1591, %v1603
    %v1606 = vmul.f32 %v1526, %v1542
    %v1607 = vmul.f32 %v1527, %v1543
    %v1608 = vlaneseq
    %v1609 = vshrl.u32 %v1608, 7
    %v1610 = vsub.s32 0, %v1609
    %v1611 = vrot.slane %v1606, %v1610
    %v1612 = vlaneseq
    %v1613 = vshrl.u32 %v1612, 7
    %v1614 = vsub.s32 0, %v1613
    %v1615 = vrot.slane %v1607, %v1614
    %v1616 = vmul.f32 %v1611, %v1500
    %v1617 = vmul.f32 %v1615, %v1501
    %v1618 = vadd.f32 %v1604, %v1616
    %v1619 = vadd.f32 %v1605, %v1617
    %v1620 = vmul.f32 %v1526, %v1560
    %v1621 = vmul.f32 %v1527, %v1561
    %v1622 = vlaneseq
    %v1623 = vshrl.u32 %v1622, 7
    %v1624 = vsub.s32 0, %v1623
    %v1625 = vrot.slane %v1620, %v1624
    %v1626 = vlaneseq
    %v1627 = vshrl.u32 %v1626, 7
    %v1628 = vsub.s32 0, %v1627
    %v1629 = vrot.slane %v1621, %v1628
    %v1630 = vmul.f32 %v1625, %v1502
    %v1631 = vmul.f32 %v1629, %v1503
    %v1632 = vadd.f32 %v1618, %v1630
    %v1633 = vadd.f32 %v1619, %v1631
    %v1634 = vmul.f32 %v1528, %v1542
    %v1635 = vmul.f32 %v1529, %v1543
    %v1636 = vlaneseq
    %v1637 = vshrl.u32 %v1636, 7
    %v1638 = vsub.s32 0, %v1637
    %v1639 = vrot.slane %v1634, %v1638
    %v1640 = vlaneseq
    %v1641 = vshrl.u32 %v1640, 7
    %v1642 = vsub.s32 0, %v1641
    %v1643 = vrot.slane %v1635, %v1642
    %v1644 = vmul.f32 %v1639, %v1504
    %v1645 = vmul.f32 %v1643, %v1505
    %v1646 = vadd.f32 %v1632, %v1644
    %v1647 = vadd.f32 %v1633, %v1645
    %v1648 = vmul.f32 %v1528, %v1560
    %v1649 = vmul.f32 %v1529, %v1561
    %v1650 = vlaneseq
    %v1651 = vshrl.u32 %v1650, 7
    %v1652 = vsub.s32 0, %v1651
    %v1653 = vrot.slane %v1648, %v1652
    %v1654 = vlaneseq
    %v1655 = vshrl.u32 %v1654, 7
    %v1656 = vsub.s32 0, %v1655
    %v1657 = vrot.slane %v1649, %v1656
    %v1658 = vmul.f32 %v1653, %v1506
    %v1659 = vmul.f32 %v1657, %v1507
    %v1660 = vadd.f32 %v1646, %v1658
    %v1661 = vadd.f32 %v1647, %v1659
    %1662 = vst [vmem:[#allocation7] sm:$0xff] %v1660
    %1663 = vst [vmem:[#allocation7 + $0x8] sm:$0xff] %v1661
    // Predicated region
    $region18: #{tpu_custom_call.1} parent=1 // pred_check
      _
    $region19: #{tpu_custom_call.1} parent=1 // pred_check_branch
      %1665 = sbr.rel (0) target = $region21
    $region20: #{tpu_custom_call.1} parent=1 // pred_region
      %s1667 = ssub.s32 256, 256
      %1668 = vsyncadd [#allocation4], %s1667
      %s1670 = sshll.u32 [#allocation7], 4
      %s1671 = int_to_ptr.vmem [resolvable:$true] %s1670
      %1673 = dma.vmem_to_hbm [thread:$0]  %s1671, 256, %s2, [#allocation4]
    $region21: #{tpu_custom_call.1} parent=1 // pred_fallthru
      _
    // Predicated region
    $region22: #{tpu_custom_call.1} parent=1 // pred_check
      _
    $region23: #{tpu_custom_call.1} parent=1 // pred_check_branch
      %1675 = sbr.rel (0) target = $region25
    $region24: #{tpu_custom_call.1} parent=1 // pred_region
      %1676 = dma.done [#allocation4], 256
    $region25: #{tpu_custom_call.1} parent=1 // pred_fallthru
      _
    %1677 = vsyncpa [#allocation3], 1
    %1678 = vsyncpa [#allocation6], 1
    %1679 = vsyncpa [#allocation4], 1

</llo_original>
